<compile_context>
chip_gen: v7x
topology: tpu7x:2x2x1
jax: 0.10.0
libtpu: 0.0.40
codegen_flags: <defaults>
</compile_context>

<pallas_src>
import jax
import jax.numpy as jnp
from jax import lax
from jax.experimental import pallas as pl
from jax.experimental.pallas import tpu as pltpu


_MAX_UNROLLED_STEPS = 16   # fully unroll the fused recurrence up to this many steps


# ----------------------------------------------------------------------------
# Pallas kernel: fused 2-layer recurrence + final Linear + Tanh
# ----------------------------------------------------------------------------
def _half_cell(pre, c):
    """One LSTM cell update for one layer.

    pre : (B, 4H) pre-activation gates, column order [i | f | o | g].
    c   : (B, H)  previous cell state (f32).
    """
    H = c.shape[-1]
    s = jax.nn.sigmoid(pre[:, :3 * H])            # [i | f | o] in one EUP slab
    g = jnp.tanh(pre[:, 3 * H:])
    i, f, o = s[:, :H], s[:, H:2 * H], s[:, 2 * H:]
    c_new = f * c + i * g
    h_new = o * jnp.tanh(c_new)
    return h_new, c_new


def _crypto_lstm_kernel(xp_ref, w_ref, b1_ref, wfct_ref, bfc_ref, out_ref):
    """Fused, pipelined 2-layer LSTM recurrence + FC + tanh.

    xp_ref   : (T, B, 4H) f32      layer-0 input projection x@Wih0 + b0, [i f o g]
    w_ref    : (2H, 8H)   f32/bf16 fused recurrent weight
                 rows    = [h0 (H) ; h1 (H)]
                 columns = [layer-0 gates (4H) | layer-1 gates (4H)], each [i f o g]
                 block structure [whh0 | wih1 ; 0 | whh1]
    b1_ref   : (1, 4H) f32         layer-1 combined bias (b_ih1 + b_hh1), [i f o g]
    wfct_ref : (O, H)  f32         final fc weight, transposed
    bfc_ref  : (1, O)  f32         final fc bias
    out_ref  : (B, O)  f32
    """
    T, B, H4 = xp_ref.shape
    H = H4 // 4
    O = out_ref.shape[-1]

    # Loop-invariant weights / bias: loaded once, stay resident across steps.
    W = w_ref[...]
    b1 = b1_ref[...]
    mm_dtype = W.dtype

    # --- pipelined fused recurrence --------------------------------------
    # Step t (1 <= t <= T-1) computes layer-0 time t and layer-1 time t-1
    # with ONE (B, 2H) x (2H, 8H) matmul.
    #
    # Step 0 (peeled): h = c = 0 so the matmul contributes nothing; layer-0
    # gates are exactly xp[0] and layer-1 keeps its zero initial state.
    zeros = jnp.zeros((B, H), jnp.float32)
    h0, c0 = _half_cell(xp_ref[0], zeros)
    h1, c1 = zeros, zeros

    def fused_step(t, h0, c0, h1, c1):
        h_cat = jnp.concatenate([h0, h1], axis=1).astype(mm_dtype)
        gates = jnp.dot(h_cat, W, preferred_element_type=jnp.float32)
        h0n, c0n = _half_cell(gates[:, :H4] + xp_ref[t], c0)     # layer-0, time t
        h1n, c1n = _half_cell(gates[:, H4:] + b1, c1)            # layer-1, time t-1
        return h0n, c0n, h1n, c1n

    if T - 1 <= _MAX_UNROLLED_STEPS:
        # Small fixed trip count: full static unroll.
        for t in range(1, T):
            h0, c0, h1, c1 = fused_step(t, h0, c0, h1, c1)
    else:
        # Larger T: bounded unroll keeps LLO visibility without vreg spills.
        def body(t, carry):
            return fused_step(t, *carry)
        h0, c0, h1, c1 = lax.fori_loop(1, T, body, (h0, c0, h1, c1), unroll=8)

    # Flush step (peeled): only layer-1 advances, consuming layer-0's final h.
    h_cat = jnp.concatenate([h0, h1], axis=1).astype(mm_dtype)
    gates1 = jnp.dot(h_cat, W[:, H4:], preferred_element_type=jnp.float32) + b1
    h1, c1 = _half_cell(gates1, c1)

    # --- final FC + tanh on the top-layer (layer-1) hidden state ----------
    wfct = wfct_ref[...]                                   # (O, H) f32
    if O == 1:
        # (H -> 1): VPU multiply + lane reduction; avoid a 1-lane-wide MXU push.
        y = jnp.sum(h1 * wfct, axis=-1, keepdims=True)     # (B, 1)
    else:
        y = lax.dot_general(h1, wfct, (((1,), (1,)), ((), ())),
                            preferred_element_type=jnp.float32)
    out_ref[...] = jnp.tanh(y + bfc_ref[...])


# ----------------------------------------------------------------------------
# Wrapper: hoisted input projection + fused-weight construction + pallas_call
# ----------------------------------------------------------------------------
def _reorder_gates(a, axis=-1):
    """PyTorch LSTM gate order [i f g o] -> kernel order [i f o g]."""
    i, f, g, o = jnp.split(a, 4, axis=axis)
    return jnp.concatenate([i, f, o, g], axis=axis)


def crypto_lstm_forward(x, params, *, recurrent_dtype=jnp.float32):
    """x: (batch, seq, input_size) f32 -> (batch, output_size) f32.

    recurrent_dtype: dtype of the fused recurrent weight matrix.  Use
    jnp.bfloat16 on v6e/v7x (native MXU dtype); activations / cell state stay
    f32 and the matmul accumulates in f32.
    """
    B, T, F = x.shape
    H = params["whh0"].shape[0]
    O = params["wfc"].shape[1]
    f32 = jnp.float32

    # ---- hoisted layer-0 input projection: one big parallel matmul in XLA ----
    wih0 = _reorder_gates(params["wih0"])                 # (F, 4H), [i f o g]
    b0 = _reorder_gates(params["b0"])                     # (1, 4H)
    xp = jnp.einsum("btf,fg->btg", x, wih0) + b0          # (B, T, 4H)
    xp = jnp.transpose(xp, (1, 0, 2)).astype(f32)         # (T, B, 4H) time-major

    # ---- fused recurrent weight (2H, 8H) ------------------------------------
    #   rows 0..H  (h0) -> [ whh0 | wih1 ]
    #   rows H..2H (h1) -> [  0   | whh1 ]
    whh0 = _reorder_gates(params["whh0"])
    wih1 = _reorder_gates(params["wih1"])
    whh1 = _reorder_gates(params["whh1"])
    top = jnp.concatenate([whh0, wih1], axis=1)                            # (H, 8H)
    bot = jnp.concatenate([jnp.zeros((H, 4 * H), f32), whh1], axis=1)      # (H, 8H)
    wcomb = jnp.concatenate([top, bot], axis=0).astype(recurrent_dtype)    # (2H, 8H)

    b1 = _reorder_gates(params["b1"]).astype(f32)         # (1, 4H) loop-invariant
    wfct = params["wfc"].T.astype(f32)                    # (O, H)
    bfc = params["bfc"].astype(f32)                       # (1, O)

    vmem = pl.BlockSpec(memory_space=pltpu.MemorySpace.VMEM)
    return pl.pallas_call(
        _crypto_lstm_kernel,
        out_shape=jax.ShapeDtypeStruct((B, O), f32),
        in_specs=[vmem] * 5,
        out_specs=vmem,
    )(xp, wcomb, b1, wfct, bfc)


# ----------------------------------------------------------------------------
# Deterministic parameter init (PyTorch-style uniform(-1/sqrt(H), 1/sqrt(H)))
# ----------------------------------------------------------------------------
def init_params(key, input_size, hidden_size, output_size):
    H = hidden_size
    bound = 1.0 / jnp.sqrt(jnp.float32(H))
    keys = jax.random.split(key, 10)
    u = lambda k, shape: jax.random.uniform(k, shape, jnp.float32, -bound, bound)
    # weights stored pre-transposed: (in_features, 4H); biases combined (b_ih + b_hh)
    return {
        "wih0": u(keys[0], (input_size, 4 * H)),
        "whh0": u(keys[1], (H, 4 * H)),
        "b0":   u(keys[2], (1, 4 * H)) + u(keys[3], (1, 4 * H)),
        "wih1": u(keys[4], (H, 4 * H)),
        "whh1": u(keys[5], (H, 4 * H)),
        "b1":   u(keys[6], (1, 4 * H)) + u(keys[7], (1, 4 * H)),
        "wfc":  u(keys[8], (H, output_size)),
        "bfc":  u(keys[9], (1, output_size)),
    }


# ----------------------------------------------------------------------------
# Pure-JAX reference (straightforward layer-by-layer math) for correctness
# ----------------------------------------------------------------------------
def reference_forward(x, p):
    B, T, F = x.shape
    H = p["whh0"].shape[0]

    def cell(x_t, h, c, wih, whh, b):
        gates = x_t @ wih + h @ whh + b
        i, f, g, o = jnp.split(gates, 4, axis=-1)
        c = jax.nn.sigmoid(f) * c + jax.nn.sigmoid(i) * jnp.tanh(g)
        h = jax.nn.sigmoid(o) * jnp.tanh(c)
        return h, c

    zeros = jnp.zeros((B, H), jnp.float32)
    h, c = zeros, zeros
    hs = []
    for t in range(T):
        h, c = cell(x[:, t], h, c, p["wih0"], p["whh0"], p["b0"])
        hs.append(h)
    h, c = zeros, zeros
    for t in range(T):
        h, c = cell(hs[t], h, c, p["wih1"], p["whh1"], p["b1"])
    return jnp.tanh(h @ p["wfc"] + p["bfc"])


if __name__ == "__main__":
    INPUT_SIZE = 4
    HIDDEN_SIZE = 32
    NUM_LAYERS = 2      # kernel is specialized for 2 layers (matches module usage)
    OUTPUT_SIZE = 1
    BATCH = 8           # multiple of 8: full sublane occupancy (perf review)
    SEQ = 8

    key = jax.random.PRNGKey(0)
    kx, kx_long, kp = jax.random.split(key, 3)
    params = init_params(kp, INPUT_SIZE, HIDDEN_SIZE, OUTPUT_SIZE)

    # 1) Small T: fully-unrolled path, f32 weights (tight check vs reference).
    x = jax.random.normal(kx, (BATCH, SEQ, INPUT_SIZE), jnp.float32)
    out = jax.block_until_ready(crypto_lstm_forward(x, params))
    ref = reference_forward(x, params)
    assert out.shape == (BATCH, OUTPUT_SIZE)
    assert jnp.allclose(out, ref, atol=1e-5, rtol=1e-5), (out, ref)

    # 2) bf16 recurrent weight (v6e/v7x MXU-native path), f32 state/accumulate.
    out_bf16 = jax.block_until_ready(
        crypto_lstm_forward(x, params, recurrent_dtype=jnp.bfloat16))
    assert jnp.allclose(out_bf16, ref, atol=5e-2, rtol=5e-2), (out_bf16, ref)

    # 3) Longer sequence exercises the bounded-unroll fori_loop path.
    SEQ_LONG = 48
    x_long = jax.random.normal(kx_long, (BATCH, SEQ_LONG, INPUT_SIZE), jnp.float32)
    out_long = jax.block_until_ready(crypto_lstm_forward(x_long, params))
    ref_long = reference_forward(x_long, params)
    assert jnp.allclose(out_long, ref_long, atol=1e-4, rtol=1e-4), (out_long, ref_long)

    print("KERNEL_OK")
</pallas_src>

<mosaic_0001>
module attributes {stable_mosaic.version = 11 : i64} {
  func.func @_crypto_lstm_kernel(%arg0: memref<8x8x128xf32, #tpu.memory_space<vmem>>, %arg1: memref<64x256xf32, #tpu.memory_space<vmem>>, %arg2: memref<1x128xf32, #tpu.memory_space<vmem>>, %arg3: memref<1x32xf32, #tpu.memory_space<vmem>>, %arg4: memref<1x1xf32, #tpu.memory_space<vmem>>, %arg5: memref<8x1xf32, #tpu.memory_space<vmem>>) attributes {dimension_semantics = [], scalar_prefetch = 0 : i64, scratch_operands = 0 : i64, tpu.core_type = #tpu.core_type<tc>} {
    %c0 = arith.constant 0 : index
    %c0_0 = arith.constant 0 : index
    %0 = vector.load %arg1[%c0, %c0_0] : memref<64x256xf32, #tpu.memory_space<vmem>>, vector<64x256xf32>
    %c0_1 = arith.constant 0 : index
    %c0_2 = arith.constant 0 : index
    %1 = vector.load %arg2[%c0_1, %c0_2] : memref<1x128xf32, #tpu.memory_space<vmem>>, vector<1x128xf32>
    %cst = arith.constant 0.000000e+00 : f32
    %2 = vector.broadcast %cst : f32 to vector<8x32xf32>
    %c0_3 = arith.constant 0 : index
    %c0_4 = arith.constant 0 : index
    %c0_5 = arith.constant 0 : index
    %3 = vector.load %arg0[%c0_3, %c0_4, %c0_5] : memref<8x8x128xf32, #tpu.memory_space<vmem>>, vector<1x8x128xf32>
    %4 = vector.shape_cast %3 : vector<1x8x128xf32> to vector<8x128xf32>
    %5 = vector.extract_strided_slice %4 {offsets = [0, 0], sizes = [8, 96], strides = [1, 1]} : vector<8x128xf32> to vector<8x96xf32>
    %6 = arith.negf %5 : vector<8x96xf32>
    %7 = math.exp %6 : vector<8x96xf32>
    %cst_6 = arith.constant 1.000000e+00 : f32
    %8 = vector.broadcast %cst_6 : f32 to vector<8x96xf32>
    %9 = arith.addf %8, %7 : vector<8x96xf32>
    %10 = arith.divf %8, %9 : vector<8x96xf32>
    %11 = vector.extract_strided_slice %4 {offsets = [0, 96], sizes = [8, 32], strides = [1, 1]} : vector<8x128xf32> to vector<8x32xf32>
    %12 = math.tanh %11 : vector<8x32xf32>
    %13 = vector.extract_strided_slice %10 {offsets = [0, 0], sizes = [8, 32], strides = [1, 1]} : vector<8x96xf32> to vector<8x32xf32>
    %14 = vector.extract_strided_slice %10 {offsets = [0, 32], sizes = [8, 32], strides = [1, 1]} : vector<8x96xf32> to vector<8x32xf32>
    %15 = vector.extract_strided_slice %10 {offsets = [0, 64], sizes = [8, 32], strides = [1, 1]} : vector<8x96xf32> to vector<8x32xf32>
    %16 = arith.mulf %14, %2 : vector<8x32xf32>
    %17 = arith.mulf %13, %12 : vector<8x32xf32>
    %18 = arith.addf %16, %17 : vector<8x32xf32>
    %19 = math.tanh %18 : vector<8x32xf32>
    %20 = arith.mulf %15, %19 : vector<8x32xf32>
    %21 = tpu.concatenate %20, %2 in 1 : vector<8x32xf32>, vector<8x32xf32> -> vector<8x64xf32>
    %cst_7 = arith.constant dense<0.000000e+00> : vector<8x256xf32>
    %22 = tpu.matmul %21, %0, %cst_7 {dimension_numbers = #tpu.dot_dimension_numbers<[1], [0], [0], [1], [0, 0, 1, 1], [], []>} : vector<8x64xf32>, vector<64x256xf32>, vector<8x256xf32> -> vector<8x256xf32>
    %23 = vector.extract_strided_slice %22 {offsets = [0, 0], sizes = [8, 128], strides = [1, 1]} : vector<8x256xf32> to vector<8x128xf32>
    %c1 = arith.constant 1 : index
    %c0_8 = arith.constant 0 : index
    %c0_9 = arith.constant 0 : index
    %24 = vector.load %arg0[%c1, %c0_8, %c0_9] : memref<8x8x128xf32, #tpu.memory_space<vmem>>, vector<1x8x128xf32>
    %25 = vector.shape_cast %24 : vector<1x8x128xf32> to vector<8x128xf32>
    %26 = arith.addf %23, %25 : vector<8x128xf32>
    %27 = vector.extract_strided_slice %26 {offsets = [0, 0], sizes = [8, 96], strides = [1, 1]} : vector<8x128xf32> to vector<8x96xf32>
    %28 = arith.negf %27 : vector<8x96xf32>
    %29 = math.exp %28 : vector<8x96xf32>
    %cst_10 = arith.constant 1.000000e+00 : f32
    %30 = vector.broadcast %cst_10 : f32 to vector<8x96xf32>
    %31 = arith.addf %30, %29 : vector<8x96xf32>
    %32 = arith.divf %30, %31 : vector<8x96xf32>
    %33 = vector.extract_strided_slice %26 {offsets = [0, 96], sizes = [8, 32], strides = [1, 1]} : vector<8x128xf32> to vector<8x32xf32>
    %34 = math.tanh %33 : vector<8x32xf32>
    %35 = vector.extract_strided_slice %32 {offsets = [0, 0], sizes = [8, 32], strides = [1, 1]} : vector<8x96xf32> to vector<8x32xf32>
    %36 = vector.extract_strided_slice %32 {offsets = [0, 32], sizes = [8, 32], strides = [1, 1]} : vector<8x96xf32> to vector<8x32xf32>
    %37 = vector.extract_strided_slice %32 {offsets = [0, 64], sizes = [8, 32], strides = [1, 1]} : vector<8x96xf32> to vector<8x32xf32>
    %38 = arith.mulf %36, %18 : vector<8x32xf32>
    %39 = arith.mulf %35, %34 : vector<8x32xf32>
    %40 = arith.addf %38, %39 : vector<8x32xf32>
    %41 = math.tanh %40 : vector<8x32xf32>
    %42 = arith.mulf %37, %41 : vector<8x32xf32>
    %43 = vector.extract_strided_slice %22 {offsets = [0, 128], sizes = [8, 128], strides = [1, 1]} : vector<8x256xf32> to vector<8x128xf32>
    %44 = vector.broadcast %1 : vector<1x128xf32> to vector<8x128xf32>
    %45 = arith.addf %43, %44 : vector<8x128xf32>
    %46 = vector.extract_strided_slice %45 {offsets = [0, 0], sizes = [8, 96], strides = [1, 1]} : vector<8x128xf32> to vector<8x96xf32>
    %47 = arith.negf %46 : vector<8x96xf32>
    %48 = math.exp %47 : vector<8x96xf32>
    %cst_11 = arith.constant 1.000000e+00 : f32
    %49 = vector.broadcast %cst_11 : f32 to vector<8x96xf32>
    %50 = arith.addf %49, %48 : vector<8x96xf32>
    %51 = arith.divf %49, %50 : vector<8x96xf32>
    %52 = vector.extract_strided_slice %45 {offsets = [0, 96], sizes = [8, 32], strides = [1, 1]} : vector<8x128xf32> to vector<8x32xf32>
    %53 = math.tanh %52 : vector<8x32xf32>
    %54 = vector.extract_strided_slice %51 {offsets = [0, 0], sizes = [8, 32], strides = [1, 1]} : vector<8x96xf32> to vector<8x32xf32>
    %55 = vector.extract_strided_slice %51 {offsets = [0, 32], sizes = [8, 32], strides = [1, 1]} : vector<8x96xf32> to vector<8x32xf32>
    %56 = vector.extract_strided_slice %51 {offsets = [0, 64], sizes = [8, 32], strides = [1, 1]} : vector<8x96xf32> to vector<8x32xf32>
    %57 = arith.mulf %55, %2 : vector<8x32xf32>
    %58 = arith.mulf %54, %53 : vector<8x32xf32>
    %59 = arith.addf %57, %58 : vector<8x32xf32>
    %60 = math.tanh %59 : vector<8x32xf32>
    %61 = arith.mulf %56, %60 : vector<8x32xf32>
    %62 = tpu.concatenate %42, %61 in 1 : vector<8x32xf32>, vector<8x32xf32> -> vector<8x64xf32>
    %cst_12 = arith.constant dense<0.000000e+00> : vector<8x256xf32>
    %63 = tpu.matmul %62, %0, %cst_12 {dimension_numbers = #tpu.dot_dimension_numbers<[1], [0], [0], [1], [0, 0, 1, 1], [], []>} : vector<8x64xf32>, vector<64x256xf32>, vector<8x256xf32> -> vector<8x256xf32>
    %64 = vector.extract_strided_slice %63 {offsets = [0, 0], sizes = [8, 128], strides = [1, 1]} : vector<8x256xf32> to vector<8x128xf32>
    %c2 = arith.constant 2 : index
    %c0_13 = arith.constant 0 : index
    %c0_14 = arith.constant 0 : index
    %65 = vector.load %arg0[%c2, %c0_13, %c0_14] : memref<8x8x128xf32, #tpu.memory_space<vmem>>, vector<1x8x128xf32>
    %66 = vector.shape_cast %65 : vector<1x8x128xf32> to vector<8x128xf32>
    %67 = arith.addf %64, %66 : vector<8x128xf32>
    %68 = vector.extract_strided_slice %67 {offsets = [0, 0], sizes = [8, 96], strides = [1, 1]} : vector<8x128xf32> to vector<8x96xf32>
    %69 = arith.negf %68 : vector<8x96xf32>
    %70 = math.exp %69 : vector<8x96xf32>
    %cst_15 = arith.constant 1.000000e+00 : f32
    %71 = vector.broadcast %cst_15 : f32 to vector<8x96xf32>
    %72 = arith.addf %71, %70 : vector<8x96xf32>
    %73 = arith.divf %71, %72 : vector<8x96xf32>
    %74 = vector.extract_strided_slice %67 {offsets = [0, 96], sizes = [8, 32], strides = [1, 1]} : vector<8x128xf32> to vector<8x32xf32>
    %75 = math.tanh %74 : vector<8x32xf32>
    %76 = vector.extract_strided_slice %73 {offsets = [0, 0], sizes = [8, 32], strides = [1, 1]} : vector<8x96xf32> to vector<8x32xf32>
    %77 = vector.extract_strided_slice %73 {offsets = [0, 32], sizes = [8, 32], strides = [1, 1]} : vector<8x96xf32> to vector<8x32xf32>
    %78 = vector.extract_strided_slice %73 {offsets = [0, 64], sizes = [8, 32], strides = [1, 1]} : vector<8x96xf32> to vector<8x32xf32>
    %79 = arith.mulf %77, %40 : vector<8x32xf32>
    %80 = arith.mulf %76, %75 : vector<8x32xf32>
    %81 = arith.addf %79, %80 : vector<8x32xf32>
    %82 = math.tanh %81 : vector<8x32xf32>
    %83 = arith.mulf %78, %82 : vector<8x32xf32>
    %84 = vector.extract_strided_slice %63 {offsets = [0, 128], sizes = [8, 128], strides = [1, 1]} : vector<8x256xf32> to vector<8x128xf32>
    %85 = vector.broadcast %1 : vector<1x128xf32> to vector<8x128xf32>
    %86 = arith.addf %84, %85 : vector<8x128xf32>
    %87 = vector.extract_strided_slice %86 {offsets = [0, 0], sizes = [8, 96], strides = [1, 1]} : vector<8x128xf32> to vector<8x96xf32>
    %88 = arith.negf %87 : vector<8x96xf32>
    %89 = math.exp %88 : vector<8x96xf32>
    %cst_16 = arith.constant 1.000000e+00 : f32
    %90 = vector.broadcast %cst_16 : f32 to vector<8x96xf32>
    %91 = arith.addf %90, %89 : vector<8x96xf32>
    %92 = arith.divf %90, %91 : vector<8x96xf32>
    %93 = vector.extract_strided_slice %86 {offsets = [0, 96], sizes = [8, 32], strides = [1, 1]} : vector<8x128xf32> to vector<8x32xf32>
    %94 = math.tanh %93 : vector<8x32xf32>
    %95 = vector.extract_strided_slice %92 {offsets = [0, 0], sizes = [8, 32], strides = [1, 1]} : vector<8x96xf32> to vector<8x32xf32>
    %96 = vector.extract_strided_slice %92 {offsets = [0, 32], sizes = [8, 32], strides = [1, 1]} : vector<8x96xf32> to vector<8x32xf32>
    %97 = vector.extract_strided_slice %92 {offsets = [0, 64], sizes = [8, 32], strides = [1, 1]} : vector<8x96xf32> to vector<8x32xf32>
    %98 = arith.mulf %96, %59 : vector<8x32xf32>
    %99 = arith.mulf %95, %94 : vector<8x32xf32>
    %100 = arith.addf %98, %99 : vector<8x32xf32>
    %101 = math.tanh %100 : vector<8x32xf32>
    %102 = arith.mulf %97, %101 : vector<8x32xf32>
    %103 = tpu.concatenate %83, %102 in 1 : vector<8x32xf32>, vector<8x32xf32> -> vector<8x64xf32>
    %cst_17 = arith.constant dense<0.000000e+00> : vector<8x256xf32>
    %104 = tpu.matmul %103, %0, %cst_17 {dimension_numbers = #tpu.dot_dimension_numbers<[1], [0], [0], [1], [0, 0, 1, 1], [], []>} : vector<8x64xf32>, vector<64x256xf32>, vector<8x256xf32> -> vector<8x256xf32>
    %105 = vector.extract_strided_slice %104 {offsets = [0, 0], sizes = [8, 128], strides = [1, 1]} : vector<8x256xf32> to vector<8x128xf32>
    %c3 = arith.constant 3 : index
    %c0_18 = arith.constant 0 : index
    %c0_19 = arith.constant 0 : index
    %106 = vector.load %arg0[%c3, %c0_18, %c0_19] : memref<8x8x128xf32, #tpu.memory_space<vmem>>, vector<1x8x128xf32>
    %107 = vector.shape_cast %106 : vector<1x8x128xf32> to vector<8x128xf32>
    %108 = arith.addf %105, %107 : vector<8x128xf32>
    %109 = vector.extract_strided_slice %108 {offsets = [0, 0], sizes = [8, 96], strides = [1, 1]} : vector<8x128xf32> to vector<8x96xf32>
    %110 = arith.negf %109 : vector<8x96xf32>
    %111 = math.exp %110 : vector<8x96xf32>
    %cst_20 = arith.constant 1.000000e+00 : f32
    %112 = vector.broadcast %cst_20 : f32 to vector<8x96xf32>
    %113 = arith.addf %112, %111 : vector<8x96xf32>
    %114 = arith.divf %112, %113 : vector<8x96xf32>
    %115 = vector.extract_strided_slice %108 {offsets = [0, 96], sizes = [8, 32], strides = [1, 1]} : vector<8x128xf32> to vector<8x32xf32>
    %116 = math.tanh %115 : vector<8x32xf32>
    %117 = vector.extract_strided_slice %114 {offsets = [0, 0], sizes = [8, 32], strides = [1, 1]} : vector<8x96xf32> to vector<8x32xf32>
    %118 = vector.extract_strided_slice %114 {offsets = [0, 32], sizes = [8, 32], strides = [1, 1]} : vector<8x96xf32> to vector<8x32xf32>
    %119 = vector.extract_strided_slice %114 {offsets = [0, 64], sizes = [8, 32], strides = [1, 1]} : vector<8x96xf32> to vector<8x32xf32>
    %120 = arith.mulf %118, %81 : vector<8x32xf32>
    %121 = arith.mulf %117, %116 : vector<8x32xf32>
    %122 = arith.addf %120, %121 : vector<8x32xf32>
    %123 = math.tanh %122 : vector<8x32xf32>
    %124 = arith.mulf %119, %123 : vector<8x32xf32>
    %125 = vector.extract_strided_slice %104 {offsets = [0, 128], sizes = [8, 128], strides = [1, 1]} : vector<8x256xf32> to vector<8x128xf32>
    %126 = vector.broadcast %1 : vector<1x128xf32> to vector<8x128xf32>
    %127 = arith.addf %125, %126 : vector<8x128xf32>
    %128 = vector.extract_strided_slice %127 {offsets = [0, 0], sizes = [8, 96], strides = [1, 1]} : vector<8x128xf32> to vector<8x96xf32>
    %129 = arith.negf %128 : vector<8x96xf32>
    %130 = math.exp %129 : vector<8x96xf32>
    %cst_21 = arith.constant 1.000000e+00 : f32
    %131 = vector.broadcast %cst_21 : f32 to vector<8x96xf32>
    %132 = arith.addf %131, %130 : vector<8x96xf32>
    %133 = arith.divf %131, %132 : vector<8x96xf32>
    %134 = vector.extract_strided_slice %127 {offsets = [0, 96], sizes = [8, 32], strides = [1, 1]} : vector<8x128xf32> to vector<8x32xf32>
    %135 = math.tanh %134 : vector<8x32xf32>
    %136 = vector.extract_strided_slice %133 {offsets = [0, 0], sizes = [8, 32], strides = [1, 1]} : vector<8x96xf32> to vector<8x32xf32>
    %137 = vector.extract_strided_slice %133 {offsets = [0, 32], sizes = [8, 32], strides = [1, 1]} : vector<8x96xf32> to vector<8x32xf32>
    %138 = vector.extract_strided_slice %133 {offsets = [0, 64], sizes = [8, 32], strides = [1, 1]} : vector<8x96xf32> to vector<8x32xf32>
    %139 = arith.mulf %137, %100 : vector<8x32xf32>
    %140 = arith.mulf %136, %135 : vector<8x32xf32>
    %141 = arith.addf %139, %140 : vector<8x32xf32>
    %142 = math.tanh %141 : vector<8x32xf32>
    %143 = arith.mulf %138, %142 : vector<8x32xf32>
    %144 = tpu.concatenate %124, %143 in 1 : vector<8x32xf32>, vector<8x32xf32> -> vector<8x64xf32>
    %cst_22 = arith.constant dense<0.000000e+00> : vector<8x256xf32>
    %145 = tpu.matmul %144, %0, %cst_22 {dimension_numbers = #tpu.dot_dimension_numbers<[1], [0], [0], [1], [0, 0, 1, 1], [], []>} : vector<8x64xf32>, vector<64x256xf32>, vector<8x256xf32> -> vector<8x256xf32>
    %146 = vector.extract_strided_slice %145 {offsets = [0, 0], sizes = [8, 128], strides = [1, 1]} : vector<8x256xf32> to vector<8x128xf32>
    %c4 = arith.constant 4 : index
    %c0_23 = arith.constant 0 : index
    %c0_24 = arith.constant 0 : index
    %147 = vector.load %arg0[%c4, %c0_23, %c0_24] : memref<8x8x128xf32, #tpu.memory_space<vmem>>, vector<1x8x128xf32>
    %148 = vector.shape_cast %147 : vector<1x8x128xf32> to vector<8x128xf32>
    %149 = arith.addf %146, %148 : vector<8x128xf32>
    %150 = vector.extract_strided_slice %149 {offsets = [0, 0], sizes = [8, 96], strides = [1, 1]} : vector<8x128xf32> to vector<8x96xf32>
    %151 = arith.negf %150 : vector<8x96xf32>
    %152 = math.exp %151 : vector<8x96xf32>
    %cst_25 = arith.constant 1.000000e+00 : f32
    %153 = vector.broadcast %cst_25 : f32 to vector<8x96xf32>
    %154 = arith.addf %153, %152 : vector<8x96xf32>
    %155 = arith.divf %153, %154 : vector<8x96xf32>
    %156 = vector.extract_strided_slice %149 {offsets = [0, 96], sizes = [8, 32], strides = [1, 1]} : vector<8x128xf32> to vector<8x32xf32>
    %157 = math.tanh %156 : vector<8x32xf32>
    %158 = vector.extract_strided_slice %155 {offsets = [0, 0], sizes = [8, 32], strides = [1, 1]} : vector<8x96xf32> to vector<8x32xf32>
    %159 = vector.extract_strided_slice %155 {offsets = [0, 32], sizes = [8, 32], strides = [1, 1]} : vector<8x96xf32> to vector<8x32xf32>
    %160 = vector.extract_strided_slice %155 {offsets = [0, 64], sizes = [8, 32], strides = [1, 1]} : vector<8x96xf32> to vector<8x32xf32>
    %161 = arith.mulf %159, %122 : vector<8x32xf32>
    %162 = arith.mulf %158, %157 : vector<8x32xf32>
    %163 = arith.addf %161, %162 : vector<8x32xf32>
    %164 = math.tanh %163 : vector<8x32xf32>
    %165 = arith.mulf %160, %164 : vector<8x32xf32>
    %166 = vector.extract_strided_slice %145 {offsets = [0, 128], sizes = [8, 128], strides = [1, 1]} : vector<8x256xf32> to vector<8x128xf32>
    %167 = vector.broadcast %1 : vector<1x128xf32> to vector<8x128xf32>
    %168 = arith.addf %166, %167 : vector<8x128xf32>
    %169 = vector.extract_strided_slice %168 {offsets = [0, 0], sizes = [8, 96], strides = [1, 1]} : vector<8x128xf32> to vector<8x96xf32>
    %170 = arith.negf %169 : vector<8x96xf32>
    %171 = math.exp %170 : vector<8x96xf32>
    %cst_26 = arith.constant 1.000000e+00 : f32
    %172 = vector.broadcast %cst_26 : f32 to vector<8x96xf32>
    %173 = arith.addf %172, %171 : vector<8x96xf32>
    %174 = arith.divf %172, %173 : vector<8x96xf32>
    %175 = vector.extract_strided_slice %168 {offsets = [0, 96], sizes = [8, 32], strides = [1, 1]} : vector<8x128xf32> to vector<8x32xf32>
    %176 = math.tanh %175 : vector<8x32xf32>
    %177 = vector.extract_strided_slice %174 {offsets = [0, 0], sizes = [8, 32], strides = [1, 1]} : vector<8x96xf32> to vector<8x32xf32>
    %178 = vector.extract_strided_slice %174 {offsets = [0, 32], sizes = [8, 32], strides = [1, 1]} : vector<8x96xf32> to vector<8x32xf32>
    %179 = vector.extract_strided_slice %174 {offsets = [0, 64], sizes = [8, 32], strides = [1, 1]} : vector<8x96xf32> to vector<8x32xf32>
    %180 = arith.mulf %178, %141 : vector<8x32xf32>
    %181 = arith.mulf %177, %176 : vector<8x32xf32>
    %182 = arith.addf %180, %181 : vector<8x32xf32>
    %183 = math.tanh %182 : vector<8x32xf32>
    %184 = arith.mulf %179, %183 : vector<8x32xf32>
    %185 = tpu.concatenate %165, %184 in 1 : vector<8x32xf32>, vector<8x32xf32> -> vector<8x64xf32>
    %cst_27 = arith.constant dense<0.000000e+00> : vector<8x256xf32>
    %186 = tpu.matmul %185, %0, %cst_27 {dimension_numbers = #tpu.dot_dimension_numbers<[1], [0], [0], [1], [0, 0, 1, 1], [], []>} : vector<8x64xf32>, vector<64x256xf32>, vector<8x256xf32> -> vector<8x256xf32>
    %187 = vector.extract_strided_slice %186 {offsets = [0, 0], sizes = [8, 128], strides = [1, 1]} : vector<8x256xf32> to vector<8x128xf32>
    %c5 = arith.constant 5 : index
    %c0_28 = arith.constant 0 : index
    %c0_29 = arith.constant 0 : index
    %188 = vector.load %arg0[%c5, %c0_28, %c0_29] : memref<8x8x128xf32, #tpu.memory_space<vmem>>, vector<1x8x128xf32>
    %189 = vector.shape_cast %188 : vector<1x8x128xf32> to vector<8x128xf32>
    %190 = arith.addf %187, %189 : vector<8x128xf32>
    %191 = vector.extract_strided_slice %190 {offsets = [0, 0], sizes = [8, 96], strides = [1, 1]} : vector<8x128xf32> to vector<8x96xf32>
    %192 = arith.negf %191 : vector<8x96xf32>
    %193 = math.exp %192 : vector<8x96xf32>
    %cst_30 = arith.constant 1.000000e+00 : f32
    %194 = vector.broadcast %cst_30 : f32 to vector<8x96xf32>
    %195 = arith.addf %194, %193 : vector<8x96xf32>
    %196 = arith.divf %194, %195 : vector<8x96xf32>
    %197 = vector.extract_strided_slice %190 {offsets = [0, 96], sizes = [8, 32], strides = [1, 1]} : vector<8x128xf32> to vector<8x32xf32>
    %198 = math.tanh %197 : vector<8x32xf32>
    %199 = vector.extract_strided_slice %196 {offsets = [0, 0], sizes = [8, 32], strides = [1, 1]} : vector<8x96xf32> to vector<8x32xf32>
    %200 = vector.extract_strided_slice %196 {offsets = [0, 32], sizes = [8, 32], strides = [1, 1]} : vector<8x96xf32> to vector<8x32xf32>
    %201 = vector.extract_strided_slice %196 {offsets = [0, 64], sizes = [8, 32], strides = [1, 1]} : vector<8x96xf32> to vector<8x32xf32>
    %202 = arith.mulf %200, %163 : vector<8x32xf32>
    %203 = arith.mulf %199, %198 : vector<8x32xf32>
    %204 = arith.addf %202, %203 : vector<8x32xf32>
    %205 = math.tanh %204 : vector<8x32xf32>
    %206 = arith.mulf %201, %205 : vector<8x32xf32>
    %207 = vector.extract_strided_slice %186 {offsets = [0, 128], sizes = [8, 128], strides = [1, 1]} : vector<8x256xf32> to vector<8x128xf32>
    %208 = vector.broadcast %1 : vector<1x128xf32> to vector<8x128xf32>
    %209 = arith.addf %207, %208 : vector<8x128xf32>
    %210 = vector.extract_strided_slice %209 {offsets = [0, 0], sizes = [8, 96], strides = [1, 1]} : vector<8x128xf32> to vector<8x96xf32>
    %211 = arith.negf %210 : vector<8x96xf32>
    %212 = math.exp %211 : vector<8x96xf32>
    %cst_31 = arith.constant 1.000000e+00 : f32
    %213 = vector.broadcast %cst_31 : f32 to vector<8x96xf32>
    %214 = arith.addf %213, %212 : vector<8x96xf32>
    %215 = arith.divf %213, %214 : vector<8x96xf32>
    %216 = vector.extract_strided_slice %209 {offsets = [0, 96], sizes = [8, 32], strides = [1, 1]} : vector<8x128xf32> to vector<8x32xf32>
    %217 = math.tanh %216 : vector<8x32xf32>
    %218 = vector.extract_strided_slice %215 {offsets = [0, 0], sizes = [8, 32], strides = [1, 1]} : vector<8x96xf32> to vector<8x32xf32>
    %219 = vector.extract_strided_slice %215 {offsets = [0, 32], sizes = [8, 32], strides = [1, 1]} : vector<8x96xf32> to vector<8x32xf32>
    %220 = vector.extract_strided_slice %215 {offsets = [0, 64], sizes = [8, 32], strides = [1, 1]} : vector<8x96xf32> to vector<8x32xf32>
    %221 = arith.mulf %219, %182 : vector<8x32xf32>
    %222 = arith.mulf %218, %217 : vector<8x32xf32>
    %223 = arith.addf %221, %222 : vector<8x32xf32>
    %224 = math.tanh %223 : vector<8x32xf32>
    %225 = arith.mulf %220, %224 : vector<8x32xf32>
    %226 = tpu.concatenate %206, %225 in 1 : vector<8x32xf32>, vector<8x32xf32> -> vector<8x64xf32>
    %cst_32 = arith.constant dense<0.000000e+00> : vector<8x256xf32>
    %227 = tpu.matmul %226, %0, %cst_32 {dimension_numbers = #tpu.dot_dimension_numbers<[1], [0], [0], [1], [0, 0, 1, 1], [], []>} : vector<8x64xf32>, vector<64x256xf32>, vector<8x256xf32> -> vector<8x256xf32>
    %228 = vector.extract_strided_slice %227 {offsets = [0, 0], sizes = [8, 128], strides = [1, 1]} : vector<8x256xf32> to vector<8x128xf32>
    %c6 = arith.constant 6 : index
    %c0_33 = arith.constant 0 : index
    %c0_34 = arith.constant 0 : index
    %229 = vector.load %arg0[%c6, %c0_33, %c0_34] : memref<8x8x128xf32, #tpu.memory_space<vmem>>, vector<1x8x128xf32>
    %230 = vector.shape_cast %229 : vector<1x8x128xf32> to vector<8x128xf32>
    %231 = arith.addf %228, %230 : vector<8x128xf32>
    %232 = vector.extract_strided_slice %231 {offsets = [0, 0], sizes = [8, 96], strides = [1, 1]} : vector<8x128xf32> to vector<8x96xf32>
    %233 = arith.negf %232 : vector<8x96xf32>
    %234 = math.exp %233 : vector<8x96xf32>
    %cst_35 = arith.constant 1.000000e+00 : f32
    %235 = vector.broadcast %cst_35 : f32 to vector<8x96xf32>
    %236 = arith.addf %235, %234 : vector<8x96xf32>
    %237 = arith.divf %235, %236 : vector<8x96xf32>
    %238 = vector.extract_strided_slice %231 {offsets = [0, 96], sizes = [8, 32], strides = [1, 1]} : vector<8x128xf32> to vector<8x32xf32>
    %239 = math.tanh %238 : vector<8x32xf32>
    %240 = vector.extract_strided_slice %237 {offsets = [0, 0], sizes = [8, 32], strides = [1, 1]} : vector<8x96xf32> to vector<8x32xf32>
    %241 = vector.extract_strided_slice %237 {offsets = [0, 32], sizes = [8, 32], strides = [1, 1]} : vector<8x96xf32> to vector<8x32xf32>
    %242 = vector.extract_strided_slice %237 {offsets = [0, 64], sizes = [8, 32], strides = [1, 1]} : vector<8x96xf32> to vector<8x32xf32>
    %243 = arith.mulf %241, %204 : vector<8x32xf32>
    %244 = arith.mulf %240, %239 : vector<8x32xf32>
    %245 = arith.addf %243, %244 : vector<8x32xf32>
    %246 = math.tanh %245 : vector<8x32xf32>
    %247 = arith.mulf %242, %246 : vector<8x32xf32>
    %248 = vector.extract_strided_slice %227 {offsets = [0, 128], sizes = [8, 128], strides = [1, 1]} : vector<8x256xf32> to vector<8x128xf32>
    %249 = vector.broadcast %1 : vector<1x128xf32> to vector<8x128xf32>
    %250 = arith.addf %248, %249 : vector<8x128xf32>
    %251 = vector.extract_strided_slice %250 {offsets = [0, 0], sizes = [8, 96], strides = [1, 1]} : vector<8x128xf32> to vector<8x96xf32>
    %252 = arith.negf %251 : vector<8x96xf32>
    %253 = math.exp %252 : vector<8x96xf32>
    %cst_36 = arith.constant 1.000000e+00 : f32
    %254 = vector.broadcast %cst_36 : f32 to vector<8x96xf32>
    %255 = arith.addf %254, %253 : vector<8x96xf32>
    %256 = arith.divf %254, %255 : vector<8x96xf32>
    %257 = vector.extract_strided_slice %250 {offsets = [0, 96], sizes = [8, 32], strides = [1, 1]} : vector<8x128xf32> to vector<8x32xf32>
    %258 = math.tanh %257 : vector<8x32xf32>
    %259 = vector.extract_strided_slice %256 {offsets = [0, 0], sizes = [8, 32], strides = [1, 1]} : vector<8x96xf32> to vector<8x32xf32>
    %260 = vector.extract_strided_slice %256 {offsets = [0, 32], sizes = [8, 32], strides = [1, 1]} : vector<8x96xf32> to vector<8x32xf32>
    %261 = vector.extract_strided_slice %256 {offsets = [0, 64], sizes = [8, 32], strides = [1, 1]} : vector<8x96xf32> to vector<8x32xf32>
    %262 = arith.mulf %260, %223 : vector<8x32xf32>
    %263 = arith.mulf %259, %258 : vector<8x32xf32>
    %264 = arith.addf %262, %263 : vector<8x32xf32>
    %265 = math.tanh %264 : vector<8x32xf32>
    %266 = arith.mulf %261, %265 : vector<8x32xf32>
    %267 = tpu.concatenate %247, %266 in 1 : vector<8x32xf32>, vector<8x32xf32> -> vector<8x64xf32>
    %cst_37 = arith.constant dense<0.000000e+00> : vector<8x256xf32>
    %268 = tpu.matmul %267, %0, %cst_37 {dimension_numbers = #tpu.dot_dimension_numbers<[1], [0], [0], [1], [0, 0, 1, 1], [], []>} : vector<8x64xf32>, vector<64x256xf32>, vector<8x256xf32> -> vector<8x256xf32>
    %269 = vector.extract_strided_slice %268 {offsets = [0, 0], sizes = [8, 128], strides = [1, 1]} : vector<8x256xf32> to vector<8x128xf32>
    %c7 = arith.constant 7 : index
    %c0_38 = arith.constant 0 : index
    %c0_39 = arith.constant 0 : index
    %270 = vector.load %arg0[%c7, %c0_38, %c0_39] : memref<8x8x128xf32, #tpu.memory_space<vmem>>, vector<1x8x128xf32>
    %271 = vector.shape_cast %270 : vector<1x8x128xf32> to vector<8x128xf32>
    %272 = arith.addf %269, %271 : vector<8x128xf32>
    %273 = vector.extract_strided_slice %272 {offsets = [0, 0], sizes = [8, 96], strides = [1, 1]} : vector<8x128xf32> to vector<8x96xf32>
    %274 = arith.negf %273 : vector<8x96xf32>
    %275 = math.exp %274 : vector<8x96xf32>
    %cst_40 = arith.constant 1.000000e+00 : f32
    %276 = vector.broadcast %cst_40 : f32 to vector<8x96xf32>
    %277 = arith.addf %276, %275 : vector<8x96xf32>
    %278 = arith.divf %276, %277 : vector<8x96xf32>
    %279 = vector.extract_strided_slice %272 {offsets = [0, 96], sizes = [8, 32], strides = [1, 1]} : vector<8x128xf32> to vector<8x32xf32>
    %280 = math.tanh %279 : vector<8x32xf32>
    %281 = vector.extract_strided_slice %278 {offsets = [0, 0], sizes = [8, 32], strides = [1, 1]} : vector<8x96xf32> to vector<8x32xf32>
    %282 = vector.extract_strided_slice %278 {offsets = [0, 32], sizes = [8, 32], strides = [1, 1]} : vector<8x96xf32> to vector<8x32xf32>
    %283 = vector.extract_strided_slice %278 {offsets = [0, 64], sizes = [8, 32], strides = [1, 1]} : vector<8x96xf32> to vector<8x32xf32>
    %284 = arith.mulf %282, %245 : vector<8x32xf32>
    %285 = arith.mulf %281, %280 : vector<8x32xf32>
    %286 = arith.addf %284, %285 : vector<8x32xf32>
    %287 = math.tanh %286 : vector<8x32xf32>
    %288 = arith.mulf %283, %287 : vector<8x32xf32>
    %289 = vector.extract_strided_slice %268 {offsets = [0, 128], sizes = [8, 128], strides = [1, 1]} : vector<8x256xf32> to vector<8x128xf32>
    %290 = vector.broadcast %1 : vector<1x128xf32> to vector<8x128xf32>
    %291 = arith.addf %289, %290 : vector<8x128xf32>
    %292 = vector.extract_strided_slice %291 {offsets = [0, 0], sizes = [8, 96], strides = [1, 1]} : vector<8x128xf32> to vector<8x96xf32>
    %293 = arith.negf %292 : vector<8x96xf32>
    %294 = math.exp %293 : vector<8x96xf32>
    %cst_41 = arith.constant 1.000000e+00 : f32
    %295 = vector.broadcast %cst_41 : f32 to vector<8x96xf32>
    %296 = arith.addf %295, %294 : vector<8x96xf32>
    %297 = arith.divf %295, %296 : vector<8x96xf32>
    %298 = vector.extract_strided_slice %291 {offsets = [0, 96], sizes = [8, 32], strides = [1, 1]} : vector<8x128xf32> to vector<8x32xf32>
    %299 = math.tanh %298 : vector<8x32xf32>
    %300 = vector.extract_strided_slice %297 {offsets = [0, 0], sizes = [8, 32], strides = [1, 1]} : vector<8x96xf32> to vector<8x32xf32>
    %301 = vector.extract_strided_slice %297 {offsets = [0, 32], sizes = [8, 32], strides = [1, 1]} : vector<8x96xf32> to vector<8x32xf32>
    %302 = vector.extract_strided_slice %297 {offsets = [0, 64], sizes = [8, 32], strides = [1, 1]} : vector<8x96xf32> to vector<8x32xf32>
    %303 = arith.mulf %301, %264 : vector<8x32xf32>
    %304 = arith.mulf %300, %299 : vector<8x32xf32>
    %305 = arith.addf %303, %304 : vector<8x32xf32>
    %306 = math.tanh %305 : vector<8x32xf32>
    %307 = arith.mulf %302, %306 : vector<8x32xf32>
    %308 = tpu.concatenate %288, %307 in 1 : vector<8x32xf32>, vector<8x32xf32> -> vector<8x64xf32>
    %309 = vector.extract_strided_slice %0 {offsets = [0, 128], sizes = [64, 128], strides = [1, 1]} : vector<64x256xf32> to vector<64x128xf32>
    %cst_42 = arith.constant dense<0.000000e+00> : vector<8x128xf32>
    %310 = tpu.matmul %308, %309, %cst_42 {dimension_numbers = #tpu.dot_dimension_numbers<[1], [0], [0], [1], [0, 0, 1, 1], [], []>} : vector<8x64xf32>, vector<64x128xf32>, vector<8x128xf32> -> vector<8x128xf32>
    %311 = vector.broadcast %1 : vector<1x128xf32> to vector<8x128xf32>
    %312 = arith.addf %310, %311 : vector<8x128xf32>
    %313 = vector.extract_strided_slice %312 {offsets = [0, 0], sizes = [8, 96], strides = [1, 1]} : vector<8x128xf32> to vector<8x96xf32>
    %314 = arith.negf %313 : vector<8x96xf32>
    %315 = math.exp %314 : vector<8x96xf32>
    %cst_43 = arith.constant 1.000000e+00 : f32
    %316 = vector.broadcast %cst_43 : f32 to vector<8x96xf32>
    %317 = arith.addf %316, %315 : vector<8x96xf32>
    %318 = arith.divf %316, %317 : vector<8x96xf32>
    %319 = vector.extract_strided_slice %312 {offsets = [0, 96], sizes = [8, 32], strides = [1, 1]} : vector<8x128xf32> to vector<8x32xf32>
    %320 = math.tanh %319 : vector<8x32xf32>
    %321 = vector.extract_strided_slice %318 {offsets = [0, 0], sizes = [8, 32], strides = [1, 1]} : vector<8x96xf32> to vector<8x32xf32>
    %322 = vector.extract_strided_slice %318 {offsets = [0, 32], sizes = [8, 32], strides = [1, 1]} : vector<8x96xf32> to vector<8x32xf32>
    %323 = vector.extract_strided_slice %318 {offsets = [0, 64], sizes = [8, 32], strides = [1, 1]} : vector<8x96xf32> to vector<8x32xf32>
    %324 = arith.mulf %322, %305 : vector<8x32xf32>
    %325 = arith.mulf %321, %320 : vector<8x32xf32>
    %326 = arith.addf %324, %325 : vector<8x32xf32>
    %327 = math.tanh %326 : vector<8x32xf32>
    %328 = arith.mulf %323, %327 : vector<8x32xf32>
    %c0_44 = arith.constant 0 : index
    %c0_45 = arith.constant 0 : index
    %329 = vector.load %arg3[%c0_44, %c0_45] : memref<1x32xf32, #tpu.memory_space<vmem>>, vector<1x32xf32>
    %330 = vector.broadcast %329 : vector<1x32xf32> to vector<8x32xf32>
    %331 = arith.mulf %328, %330 : vector<8x32xf32>
    %cst_46 = arith.constant dense<0.000000e+00> : vector<8xf32>
    %332 = vector.multi_reduction <add>, %331, %cst_46 [1] : vector<8x32xf32> to vector<8xf32>
    %333 = vector.shape_cast %332 : vector<8xf32> to vector<8x1xf32>
    %c0_47 = arith.constant 0 : index
    %c0_48 = arith.constant 0 : index
    %334 = vector.load %arg4[%c0_47, %c0_48] : memref<1x1xf32, #tpu.memory_space<vmem>>, vector<1x1xf32>
    %335 = vector.broadcast %334 : vector<1x1xf32> to vector<8x1xf32>
    %336 = arith.addf %333, %335 : vector<8x1xf32>
    %337 = math.tanh %336 : vector<8x1xf32>
    %c0_49 = arith.constant 0 : index
    %c0_50 = arith.constant 0 : index
    %338 = vector.load %arg5[%c0_49, %c0_50] : memref<8x1xf32, #tpu.memory_space<vmem>>, vector<8x1xf32>
    tpu.vector_store %arg5[%c0_49, %c0_50], %337 {strides = array<i32>} : memref<8x1xf32, #tpu.memory_space<vmem>>, vector<8x1xf32>,
    return
  }
}

</mosaic_0001>

<llo_original>
// kernel: tpu_custom_call.1
$region0: #{tpu_custom_call.1}
  #allocation0 [shape = 'u32[]', space=smem, size = 0x4, offset = 0x4, fixed_abs, tag = 'smem constant byte address 0x4 - core index']
  #allocation1 [shape = 'u32[144,128]{1,0:T(1,128)}', space=vmem, size = 0x12000, scoped, tag = 'internal scratch']
  #allocation2 [shape = 'f32[1,1]{1,0:T(1,128)S(1)}', space=vmem, size = 0x200, scoped, tag = 'scoped memory for tpu_custom_call.1']
  %s0 = inlined_call_operand.hbm [shape: f32[8,8,128], index: 0, kind: input, shape index: {}]
  %s1 = inlined_call_operand.hbm [shape: f32[64,256], index: 1, kind: input, shape index: {}]
  %s2 = inlined_call_operand.vmem [shape: f32[1,128], index: 2, kind: input, shape index: {}]
  %s3 = inlined_call_operand.vmem [shape: f32[1,32], index: 3, kind: input, shape index: {}]
  %s4 = inlined_call_operand.<no memory space> [shape: f32[1,1], index: 4, kind: input, shape index: {}]
  %s5 = inlined_call_operand.vmem [shape: f32[8,1], index: 5, kind: output, shape index: {}]
  %s6 = sld [smem:[#allocation0]]
  $region38: #{tpu_custom_call.1} parent=0
    _
  %s8 = ssub.s32 1, %s6
  %s9 = scalar_select 0, %s8, %s6
  %v10 = vstv %s4
  %11 = vst [vmem:[#allocation2] sm:$0x1] %v10
  $region1: #{tpu_custom_call.1} parent=0
    #allocation3 [shape = 'u8[32768]{0}', space=vmem, size = 0x8000, scoped, tag = 'input window, operand 0, single buffered']
    #allocation4 [shape = 's32[1]{0}', space=sflag, size = 0x4, scoped, tag = 'scoped memory for tpu_custom_call.1']
    #allocation5 [shape = 'u8[65536]{0}', space=vmem, size = 0x10000, scoped, tag = 'input window, operand 1, single buffered']
    #allocation6 [shape = 's32[1]{0}', space=sflag, size = 0x4, scoped, tag = 'scoped memory for tpu_custom_call.1']
    %12 = vsyncpa [#allocation4], 0
    %13 = vsyncpa [#allocation6], 0
    // Predicated region
    $region2: #{tpu_custom_call.1} parent=1 // pred_check
      _
    $region3: #{tpu_custom_call.1} parent=1 // pred_check_branch
      %15 = sbr.rel (0) target = $region5
    $region4: #{tpu_custom_call.1} parent=1 // pred_region
      %s17 = ssub.s32 1024, 1024
      %18 = vsyncadd [#allocation4], %s17
      %s19 = sshll.u32 [#allocation3], 4
      %s20 = int_to_ptr.vmem [resolvable:$true] %s19
      %25 = dma.hbm_to_vmem [thread:$0]  %s0, 1024, %s20, [#allocation4], 128, 128, 8
    $region5: #{tpu_custom_call.1} parent=1 // pred_fallthru
      _
    // Predicated region
    $region6: #{tpu_custom_call.1} parent=1 // pred_check
      _
    $region7: #{tpu_custom_call.1} parent=1 // pred_check_branch
      %27 = sbr.rel (0) target = $region9
    $region8: #{tpu_custom_call.1} parent=1 // pred_region
      %s29 = ssub.s32 2048, 2048
      %30 = vsyncadd [#allocation6], %s29
      %s31 = sshll.u32 [#allocation5], 4
      %s32 = int_to_ptr.vmem [resolvable:$true] %s31
      %37 = dma.hbm_to_vmem [thread:$0]  %s1, 2048, %s32, [#allocation6], 256, 256, 16
    $region9: #{tpu_custom_call.1} parent=1 // pred_fallthru
      _
    // Predicated region
    $region10: #{tpu_custom_call.1} parent=1 // pred_check
      _
    $region11: #{tpu_custom_call.1} parent=1 // pred_check_branch
      %39 = sbr.rel (0) target = $region13
    $region12: #{tpu_custom_call.1} parent=1 // pred_region
      _
    $region13: #{tpu_custom_call.1} parent=1 // pred_fallthru
      _
    // Predicated region
    $region14: #{tpu_custom_call.1} parent=1 // pred_check
      _
    $region15: #{tpu_custom_call.1} parent=1 // pred_check_branch
      %41 = sbr.rel (0) target = $region17
    $region16: #{tpu_custom_call.1} parent=1 // pred_region
      _
    $region17: #{tpu_custom_call.1} parent=1 // pred_fallthru
      _
    // Predicated region
    $region18: #{tpu_custom_call.1} parent=1 // pred_check
      _
    $region19: #{tpu_custom_call.1} parent=1 // pred_check_branch
      %43 = sbr.rel (0) target = $region21
    $region20: #{tpu_custom_call.1} parent=1 // pred_region
      _
    $region21: #{tpu_custom_call.1} parent=1 // pred_fallthru
      _
    // Predicated region
    $region22: #{tpu_custom_call.1} parent=1 // pred_check
      _
    $region23: #{tpu_custom_call.1} parent=1 // pred_check_branch
      %45 = sbr.rel (0) target = $region25
    $region24: #{tpu_custom_call.1} parent=1 // pred_region
      %46 = dma.done [#allocation4], 1024
    $region25: #{tpu_custom_call.1} parent=1 // pred_fallthru
      _
    // Predicated region
    $region26: #{tpu_custom_call.1} parent=1 // pred_check
      _
    $region27: #{tpu_custom_call.1} parent=1 // pred_check_branch
      %48 = sbr.rel (0) target = $region29
    $region28: #{tpu_custom_call.1} parent=1 // pred_region
      %49 = dma.done [#allocation6], 2048
    $region29: #{tpu_custom_call.1} parent=1 // pred_fallthru
      _
    %v50 = vld [vmem:[#allocation5] sm:$0xff]
    %v51 = vld [vmem:[#allocation5 + $0x8] sm:$0xff]
    %v52 = vld [vmem:[#allocation5 + $0x10] sm:$0xff]
    %v53 = vld [vmem:[#allocation5 + $0x18] sm:$0xff]
    %v54 = vld [vmem:[#allocation5 + $0x20] sm:$0xff]
    %v55 = vld [vmem:[#allocation5 + $0x28] sm:$0xff]
    %v56 = vld [vmem:[#allocation5 + $0x30] sm:$0xff]
    %v57 = vld [vmem:[#allocation5 + $0x38] sm:$0xff]
    %v58 = vld [vmem:[#allocation5 + $0x40] sm:$0xff]
    %v59 = vld [vmem:[#allocation5 + $0x48] sm:$0xff]
    %v60 = vld [vmem:[#allocation5 + $0x50] sm:$0xff]
    %v61 = vld [vmem:[#allocation5 + $0x58] sm:$0xff]
    %v62 = vld [vmem:[#allocation5 + $0x60] sm:$0xff]
    %v63 = vld [vmem:[#allocation5 + $0x68] sm:$0xff]
    %v64 = vld [vmem:[#allocation5 + $0x70] sm:$0xff]
    %v65 = vld [vmem:[#allocation5 + $0x78] sm:$0xff]
    %v66 = vld [vmem:[%s2] sm:$0x1]
    %v67 = vld [vmem:[#allocation3] sm:$0xff]
    %v68 = vxor.u32 %v67, 2147483648
    %v69 = vmul.f32 %v68, 1.442695
    %v70 = vpow.pop %v69
    %v71 = vadd.f32 %v70, 1.0
    %v72 = vrcp.pop %v71
    %v73 = vmul.f32 1.0, %v72
    %v74 = vtanh.pop %v67
    %v75 = vmul.f32 %v73, 0.0
    %77 = vrot.lane.b32.xlu0 %v74, 32
    %v78 = vpop.permute.xlu0 %77
    %v80 = vmul.f32 %v73, %v78
    %82 = vrot.lane.b32.xlu0 %v80, 32
    %v83 = vpop.permute.xlu0 %82
    %v85 = vadd.f32 %v75, %v83
    %v86 = vtanh.pop %v85
    %88 = vrot.lane.b32.xlu0 %v86, 32
    %v89 = vpop.permute.xlu0 %88
    %v91 = vmul.f32 %v73, %v89
    %93 = vrot.lane.b32.xlu0 %v91, 64
    %v94 = vpop.permute.xlu0 %93
    %vm96 = vcmask 261120
    %v97 = vsel %vm96, %v94, 0.0
    %vm98 = vcmask 523264
    %v100 = vsel %vm98, %v97, 0
    %102 = vmatprep.subr.mxu0 %v51
    %103 = vmatpush1.msra.mxu0 %v50
    %104 = vmatprep.subr.mxu0 %v53
    %105 = vmatpush1.msra.mxu0 %v52
    %106 = vmatprep.subr.mxu0 %v55
    %107 = vmatpush1.msra.mxu0 %v54
    %108 = vmatprep.subr.mxu0 %v57
    %109 = vmatpush1.msra.mxu0 %v56
    %110 = vmatprep.subr.mxu0 %v59
    %111 = vmatpush1.msra.mxu0 %v58
    %112 = vmatprep.subr.mxu0 %v61
    %113 = vmatpush1.msra.mxu0 %v60
    %114 = vmatprep.subr.mxu0 %v63
    %115 = vmatpush1.msra.mxu0 %v62
    %116 = vmatprep.subr.mxu0 %v65
    %117 = vmatpush1.msra.mxu0 %v64
    %118 = vmatprep.subr.mxu0 0.0
    %119 = vmatpush1.msra.mxu0 0.0
    %120 = vmatprep.subr.mxu0 0.0
    %121 = vmatpush1.msra.mxu0 0.0
    %122 = vmatprep.subr.mxu0 0.0
    %123 = vmatpush1.msra.mxu0 0.0
    %124 = vmatprep.subr.mxu0 0.0
    %125 = vmatpush1.msra.mxu0 0.0
    %126 = vmatprep.subr.mxu0 0.0
    %127 = vmatpush1.msra.mxu0 0.0
    %128 = vmatprep.subr.mxu0 0.0
    %129 = vmatpush1.msra.mxu0 0.0
    %130 = vmatprep.subr.mxu0 0.0
    %131 = vmatpush1.msra.mxu0 0.0
    %132 = vmatprep.subr.mxu0 0.0
    %133 = vmatpush1.msra.mxu0 0.0
    %134 = vmatprep.subr.mxu0 0.0
    %135 = vmatpush1.msra.mxu0 0.0
    %136 = vmatprep.subr.mxu0 0.0
    %137 = vmatpush1.msra.mxu0 0.0
    %138 = vmatprep.subr.mxu0 0.0
    %139 = vmatpush1.msra.mxu0 0.0
    %140 = vmatprep.subr.mxu0 0.0
    %141 = vmatpush1.msra.mxu0 0.0
    %142 = vmatprep.subr.mxu0 0.0
    %143 = vmatpush1.msra.mxu0 0.0
    %144 = vmatprep.subr.mxu0 0.0
    %145 = vmatpush1.msra.mxu0 0.0
    %146 = vmatprep.subr.mxu0 0.0
    %147 = vmatpush1.msra.mxu0 0.0
    %148 = vmatprep.subr.mxu0 0.0
    %149 = vmatpush1.msra.mxu0 0.0
    %150 = vmatprep.subr.mxu0 0.0
    %151 = vmatpush1.msra.mxu0 0.0
    %152 = vmatprep.subr.mxu0 0.0
    %153 = vmatpush1.msra.mxu0 0.0
    %154 = vmatprep.subr.mxu0 0.0
    %155 = vmatpush1.msra.mxu0 0.0
    %156 = vmatprep.subr.mxu0 0.0
    %157 = vmatpush1.msra.mxu0 0.0
    %158 = vmatprep.subr.mxu0 0.0
    %159 = vmatpush1.msra.mxu0 0.0
    %160 = vmatprep.subr.mxu0 0.0
    %161 = vmatpush1.msra.mxu0 0.0
    %162 = vmatprep.subr.mxu0 0.0
    %163 = vmatpush1.msra.mxu0 0.0
    %164 = vmatprep.subr.mxu0 0.0
    %165 = vmatpush1.msra.mxu0 0.0
    %166 = vmatprep.mubr.f32.mxu0 0.0
    %167 = vmatmul.mubr.f32.gmra.mrb[0].mxu0 %v100
    %v168 = vpop.f32.mrb[0].mxu0
    %v169 = vadd.f32 0.0, %v168
    %v170 = vpop.f32.mrb[0].mxu0
    %v171 = vadd.f32 0.0, %v170
    %172 = vdwg.mxu0
    %s173 = scalar_lea.vmem [#allocation3], 8
    %v174 = vld [vmem:[%s173] sm:$0xff]
    %v175 = vadd.f32 %v169, %v174
    %v176 = vxor.u32 %v175, 2147483648
    %v177 = vmul.f32 %v176, 1.442695
    %v178 = vpow.pop %v177
    %v179 = vadd.f32 %v178, 1.0
    %v180 = vrcp.pop %v179
    %v181 = vmul.f32 1.0, %v180
    %v182 = vtanh.pop %v175
    %v183 = vmul.f32 %v181, %v85
    %185 = vrot.lane.b32.xlu0 %v182, 32
    %v186 = vpop.permute.xlu0 %185
    %v188 = vmul.f32 %v181, %v186
    %190 = vrot.lane.b32.xlu0 %v188, 32
    %v191 = vpop.permute.xlu0 %190
    %v193 = vadd.f32 %v183, %v191
    %v194 = vtanh.pop %v193
    %196 = vrot.lane.b32.xlu0 %v194, 32
    %v197 = vpop.permute.xlu0 %196
    %v199 = vmul.f32 %v181, %v197
    %v201 = vlaneseq
    %v202 = vshrl.u32 %v201, 7
    %v203 = vsub.s32 0, %v202
    %v204 = vrot.slane %v66, %v203
    %v206 = vadd.f32 %v171, %v204
    %v207 = vxor.u32 %v206, 2147483648
    %v208 = vmul.f32 %v207, 1.442695
    %v209 = vpow.pop %v208
    %v210 = vadd.f32 %v209, 1.0
    %v211 = vrcp.pop %v210
    %v212 = vmul.f32 1.0, %v211
    %v213 = vtanh.pop %v206
    %v214 = vmul.f32 %v212, 0.0
    %216 = vrot.lane.b32.xlu0 %v213, 32
    %v217 = vpop.permute.xlu0 %216
    %v219 = vmul.f32 %v212, %v217
    %221 = vrot.lane.b32.xlu0 %v219, 32
    %v222 = vpop.permute.xlu0 %221
    %v224 = vadd.f32 %v214, %v222
    %v225 = vtanh.pop %v224
    %227 = vrot.lane.b32.xlu0 %v225, 32
    %v228 = vpop.permute.xlu0 %227
    %v230 = vmul.f32 %v212, %v228
    %232 = vrot.lane.b32.xlu0 %v199, 64
    %v233 = vpop.permute.xlu0 %232
    %236 = vrot.lane.b32.xlu0 %v230, 96
    %v237 = vpop.permute.xlu0 %236
    %v239 = vsel %vm96, %v233, %v237
    %v241 = vsel %vm98, %v239, 0
    %243 = vmatprep.subr.mxu0 %v51
    %244 = vmatpush1.msra.mxu0 %v50
    %245 = vmatprep.subr.mxu0 %v53
    %246 = vmatpush1.msra.mxu0 %v52
    %247 = vmatprep.subr.mxu0 %v55
    %248 = vmatpush1.msra.mxu0 %v54
    %249 = vmatprep.subr.mxu0 %v57
    %250 = vmatpush1.msra.mxu0 %v56
    %251 = vmatprep.subr.mxu0 %v59
    %252 = vmatpush1.msra.mxu0 %v58
    %253 = vmatprep.subr.mxu0 %v61
    %254 = vmatpush1.msra.mxu0 %v60
    %255 = vmatprep.subr.mxu0 %v63
    %256 = vmatpush1.msra.mxu0 %v62
    %257 = vmatprep.subr.mxu0 %v65
    %258 = vmatpush1.msra.mxu0 %v64
    %259 = vmatprep.subr.mxu0 0.0
    %260 = vmatpush1.msra.mxu0 0.0
    %261 = vmatprep.subr.mxu0 0.0
    %262 = vmatpush1.msra.mxu0 0.0
    %263 = vmatprep.subr.mxu0 0.0
    %264 = vmatpush1.msra.mxu0 0.0
    %265 = vmatprep.subr.mxu0 0.0
    %266 = vmatpush1.msra.mxu0 0.0
    %267 = vmatprep.subr.mxu0 0.0
    %268 = vmatpush1.msra.mxu0 0.0
    %269 = vmatprep.subr.mxu0 0.0
    %270 = vmatpush1.msra.mxu0 0.0
    %271 = vmatprep.subr.mxu0 0.0
    %272 = vmatpush1.msra.mxu0 0.0
    %273 = vmatprep.subr.mxu0 0.0
    %274 = vmatpush1.msra.mxu0 0.0
    %275 = vmatprep.subr.mxu0 0.0
    %276 = vmatpush1.msra.mxu0 0.0
    %277 = vmatprep.subr.mxu0 0.0
    %278 = vmatpush1.msra.mxu0 0.0
    %279 = vmatprep.subr.mxu0 0.0
    %280 = vmatpush1.msra.mxu0 0.0
    %281 = vmatprep.subr.mxu0 0.0
    %282 = vmatpush1.msra.mxu0 0.0
    %283 = vmatprep.subr.mxu0 0.0
    %284 = vmatpush1.msra.mxu0 0.0
    %285 = vmatprep.subr.mxu0 0.0
    %286 = vmatpush1.msra.mxu0 0.0
    %287 = vmatprep.subr.mxu0 0.0
    %288 = vmatpush1.msra.mxu0 0.0
    %289 = vmatprep.subr.mxu0 0.0
    %290 = vmatpush1.msra.mxu0 0.0
    %291 = vmatprep.subr.mxu0 0.0
    %292 = vmatpush1.msra.mxu0 0.0
    %293 = vmatprep.subr.mxu0 0.0
    %294 = vmatpush1.msra.mxu0 0.0
    %295 = vmatprep.subr.mxu0 0.0
    %296 = vmatpush1.msra.mxu0 0.0
    %297 = vmatprep.subr.mxu0 0.0
    %298 = vmatpush1.msra.mxu0 0.0
    %299 = vmatprep.subr.mxu0 0.0
    %300 = vmatpush1.msra.mxu0 0.0
    %301 = vmatprep.subr.mxu0 0.0
    %302 = vmatpush1.msra.mxu0 0.0
    %303 = vmatprep.subr.mxu0 0.0
    %304 = vmatpush1.msra.mxu0 0.0
    %305 = vmatprep.subr.mxu0 0.0
    %306 = vmatpush1.msra.mxu0 0.0
    %307 = vmatprep.mubr.f32.mxu0 0.0
    %308 = vmatmul.mubr.f32.gmra.mrb[0].mxu0 %v241
    %v309 = vpop.f32.mrb[0].mxu0
    %v310 = vadd.f32 0.0, %v309
    %v311 = vpop.f32.mrb[0].mxu0
    %v312 = vadd.f32 0.0, %v311
    %313 = vdwg.mxu0
    %s314 = scalar_lea.vmem [#allocation3], 16
    %v315 = vld [vmem:[%s314] sm:$0xff]
    %v316 = vadd.f32 %v310, %v315
    %v317 = vxor.u32 %v316, 2147483648
    %v318 = vmul.f32 %v317, 1.442695
    %v319 = vpow.pop %v318
    %v320 = vadd.f32 %v319, 1.0
    %v321 = vrcp.pop %v320
    %v322 = vmul.f32 1.0, %v321
    %v323 = vtanh.pop %v316
    %v324 = vmul.f32 %v322, %v193
    %326 = vrot.lane.b32.xlu0 %v323, 32
    %v327 = vpop.permute.xlu0 %326
    %v329 = vmul.f32 %v322, %v327
    %331 = vrot.lane.b32.xlu0 %v329, 32
    %v332 = vpop.permute.xlu0 %331
    %v334 = vadd.f32 %v324, %v332
    %v335 = vtanh.pop %v334
    %337 = vrot.lane.b32.xlu0 %v335, 32
    %v338 = vpop.permute.xlu0 %337
    %v340 = vmul.f32 %v322, %v338
    %v341 = vadd.f32 %v312, %v204
    %v342 = vxor.u32 %v341, 2147483648
    %v343 = vmul.f32 %v342, 1.442695
    %v344 = vpow.pop %v343
    %v345 = vadd.f32 %v344, 1.0
    %v346 = vrcp.pop %v345
    %v347 = vmul.f32 1.0, %v346
    %v348 = vtanh.pop %v341
    %v349 = vmul.f32 %v347, %v224
    %351 = vrot.lane.b32.xlu0 %v348, 32
    %v352 = vpop.permute.xlu0 %351
    %v354 = vmul.f32 %v347, %v352
    %356 = vrot.lane.b32.xlu0 %v354, 32
    %v357 = vpop.permute.xlu0 %356
    %v359 = vadd.f32 %v349, %v357
    %v360 = vtanh.pop %v359
    %362 = vrot.lane.b32.xlu0 %v360, 32
    %v363 = vpop.permute.xlu0 %362
    %v365 = vmul.f32 %v347, %v363
    %367 = vrot.lane.b32.xlu0 %v340, 64
    %v368 = vpop.permute.xlu0 %367
    %371 = vrot.lane.b32.xlu0 %v365, 96
    %v372 = vpop.permute.xlu0 %371
    %v374 = vsel %vm96, %v368, %v372
    %v376 = vsel %vm98, %v374, 0
    %378 = vmatprep.subr.mxu0 %v51
    %379 = vmatpush1.msra.mxu0 %v50
    %380 = vmatprep.subr.mxu0 %v53
    %381 = vmatpush1.msra.mxu0 %v52
    %382 = vmatprep.subr.mxu0 %v55
    %383 = vmatpush1.msra.mxu0 %v54
    %384 = vmatprep.subr.mxu0 %v57
    %385 = vmatpush1.msra.mxu0 %v56
    %386 = vmatprep.subr.mxu0 %v59
    %387 = vmatpush1.msra.mxu0 %v58
    %388 = vmatprep.subr.mxu0 %v61
    %389 = vmatpush1.msra.mxu0 %v60
    %390 = vmatprep.subr.mxu0 %v63
    %391 = vmatpush1.msra.mxu0 %v62
    %392 = vmatprep.subr.mxu0 %v65
    %393 = vmatpush1.msra.mxu0 %v64
    %394 = vmatprep.subr.mxu0 0.0
    %395 = vmatpush1.msra.mxu0 0.0
    %396 = vmatprep.subr.mxu0 0.0
    %397 = vmatpush1.msra.mxu0 0.0
    %398 = vmatprep.subr.mxu0 0.0
    %399 = vmatpush1.msra.mxu0 0.0
    %400 = vmatprep.subr.mxu0 0.0
    %401 = vmatpush1.msra.mxu0 0.0
    %402 = vmatprep.subr.mxu0 0.0
    %403 = vmatpush1.msra.mxu0 0.0
    %404 = vmatprep.subr.mxu0 0.0
    %405 = vmatpush1.msra.mxu0 0.0
    %406 = vmatprep.subr.mxu0 0.0
    %407 = vmatpush1.msra.mxu0 0.0
    %408 = vmatprep.subr.mxu0 0.0
    %409 = vmatpush1.msra.mxu0 0.0
    %410 = vmatprep.subr.mxu0 0.0
    %411 = vmatpush1.msra.mxu0 0.0
    %412 = vmatprep.subr.mxu0 0.0
    %413 = vmatpush1.msra.mxu0 0.0
    %414 = vmatprep.subr.mxu0 0.0
    %415 = vmatpush1.msra.mxu0 0.0
    %416 = vmatprep.subr.mxu0 0.0
    %417 = vmatpush1.msra.mxu0 0.0
    %418 = vmatprep.subr.mxu0 0.0
    %419 = vmatpush1.msra.mxu0 0.0
    %420 = vmatprep.subr.mxu0 0.0
    %421 = vmatpush1.msra.mxu0 0.0
    %422 = vmatprep.subr.mxu0 0.0
    %423 = vmatpush1.msra.mxu0 0.0
    %424 = vmatprep.subr.mxu0 0.0
    %425 = vmatpush1.msra.mxu0 0.0
    %426 = vmatprep.subr.mxu0 0.0
    %427 = vmatpush1.msra.mxu0 0.0
    %428 = vmatprep.subr.mxu0 0.0
    %429 = vmatpush1.msra.mxu0 0.0
    %430 = vmatprep.subr.mxu0 0.0
    %431 = vmatpush1.msra.mxu0 0.0
    %432 = vmatprep.subr.mxu0 0.0
    %433 = vmatpush1.msra.mxu0 0.0
    %434 = vmatprep.subr.mxu0 0.0
    %435 = vmatpush1.msra.mxu0 0.0
    %436 = vmatprep.subr.mxu0 0.0
    %437 = vmatpush1.msra.mxu0 0.0
    %438 = vmatprep.subr.mxu0 0.0
    %439 = vmatpush1.msra.mxu0 0.0
    %440 = vmatprep.subr.mxu0 0.0
    %441 = vmatpush1.msra.mxu0 0.0
    %442 = vmatprep.mubr.f32.mxu0 0.0
    %443 = vmatmul.mubr.f32.gmra.mrb[0].mxu0 %v376
    %v444 = vpop.f32.mrb[0].mxu0
    %v445 = vadd.f32 0.0, %v444
    %v446 = vpop.f32.mrb[0].mxu0
    %v447 = vadd.f32 0.0, %v446
    %448 = vdwg.mxu0
    %s449 = scalar_lea.vmem [#allocation3], 24
    %v450 = vld [vmem:[%s449] sm:$0xff]
    %v451 = vadd.f32 %v445, %v450
    %v452 = vxor.u32 %v451, 2147483648
    %v453 = vmul.f32 %v452, 1.442695
    %v454 = vpow.pop %v453
    %v455 = vadd.f32 %v454, 1.0
    %v456 = vrcp.pop %v455
    %v457 = vmul.f32 1.0, %v456
    %v458 = vtanh.pop %v451
    %v459 = vmul.f32 %v457, %v334
    %461 = vrot.lane.b32.xlu0 %v458, 32
    %v462 = vpop.permute.xlu0 %461
    %v464 = vmul.f32 %v457, %v462
    %466 = vrot.lane.b32.xlu0 %v464, 32
    %v467 = vpop.permute.xlu0 %466
    %v469 = vadd.f32 %v459, %v467
    %v470 = vtanh.pop %v469
    %472 = vrot.lane.b32.xlu0 %v470, 32
    %v473 = vpop.permute.xlu0 %472
    %v475 = vmul.f32 %v457, %v473
    %v476 = vadd.f32 %v447, %v204
    %v477 = vxor.u32 %v476, 2147483648
    %v478 = vmul.f32 %v477, 1.442695
    %v479 = vpow.pop %v478
    %v480 = vadd.f32 %v479, 1.0
    %v481 = vrcp.pop %v480
    %v482 = vmul.f32 1.0, %v481
    %v483 = vtanh.pop %v476
    %v484 = vmul.f32 %v482, %v359
    %486 = vrot.lane.b32.xlu0 %v483, 32
    %v487 = vpop.permute.xlu0 %486
    %v489 = vmul.f32 %v482, %v487
    %491 = vrot.lane.b32.xlu0 %v489, 32
    %v492 = vpop.permute.xlu0 %491
    %v494 = vadd.f32 %v484, %v492
    %v495 = vtanh.pop %v494
    %497 = vrot.lane.b32.xlu0 %v495, 32
    %v498 = vpop.permute.xlu0 %497
    %v500 = vmul.f32 %v482, %v498
    %502 = vrot.lane.b32.xlu0 %v475, 64
    %v503 = vpop.permute.xlu0 %502
    %506 = vrot.lane.b32.xlu0 %v500, 96
    %v507 = vpop.permute.xlu0 %506
    %v509 = vsel %vm96, %v503, %v507
    %v511 = vsel %vm98, %v509, 0
    %513 = vmatprep.subr.mxu0 %v51
    %514 = vmatpush1.msra.mxu0 %v50
    %515 = vmatprep.subr.mxu0 %v53
    %516 = vmatpush1.msra.mxu0 %v52
    %517 = vmatprep.subr.mxu0 %v55
    %518 = vmatpush1.msra.mxu0 %v54
    %519 = vmatprep.subr.mxu0 %v57
    %520 = vmatpush1.msra.mxu0 %v56
    %521 = vmatprep.subr.mxu0 %v59
    %522 = vmatpush1.msra.mxu0 %v58
    %523 = vmatprep.subr.mxu0 %v61
    %524 = vmatpush1.msra.mxu0 %v60
    %525 = vmatprep.subr.mxu0 %v63
    %526 = vmatpush1.msra.mxu0 %v62
    %527 = vmatprep.subr.mxu0 %v65
    %528 = vmatpush1.msra.mxu0 %v64
    %529 = vmatprep.subr.mxu0 0.0
    %530 = vmatpush1.msra.mxu0 0.0
    %531 = vmatprep.subr.mxu0 0.0
    %532 = vmatpush1.msra.mxu0 0.0
    %533 = vmatprep.subr.mxu0 0.0
    %534 = vmatpush1.msra.mxu0 0.0
    %535 = vmatprep.subr.mxu0 0.0
    %536 = vmatpush1.msra.mxu0 0.0
    %537 = vmatprep.subr.mxu0 0.0
    %538 = vmatpush1.msra.mxu0 0.0
    %539 = vmatprep.subr.mxu0 0.0
    %540 = vmatpush1.msra.mxu0 0.0
    %541 = vmatprep.subr.mxu0 0.0
    %542 = vmatpush1.msra.mxu0 0.0
    %543 = vmatprep.subr.mxu0 0.0
    %544 = vmatpush1.msra.mxu0 0.0
    %545 = vmatprep.subr.mxu0 0.0
    %546 = vmatpush1.msra.mxu0 0.0
    %547 = vmatprep.subr.mxu0 0.0
    %548 = vmatpush1.msra.mxu0 0.0
    %549 = vmatprep.subr.mxu0 0.0
    %550 = vmatpush1.msra.mxu0 0.0
    %551 = vmatprep.subr.mxu0 0.0
    %552 = vmatpush1.msra.mxu0 0.0
    %553 = vmatprep.subr.mxu0 0.0
    %554 = vmatpush1.msra.mxu0 0.0
    %555 = vmatprep.subr.mxu0 0.0
    %556 = vmatpush1.msra.mxu0 0.0
    %557 = vmatprep.subr.mxu0 0.0
    %558 = vmatpush1.msra.mxu0 0.0
    %559 = vmatprep.subr.mxu0 0.0
    %560 = vmatpush1.msra.mxu0 0.0
    %561 = vmatprep.subr.mxu0 0.0
    %562 = vmatpush1.msra.mxu0 0.0
    %563 = vmatprep.subr.mxu0 0.0
    %564 = vmatpush1.msra.mxu0 0.0
    %565 = vmatprep.subr.mxu0 0.0
    %566 = vmatpush1.msra.mxu0 0.0
    %567 = vmatprep.subr.mxu0 0.0
    %568 = vmatpush1.msra.mxu0 0.0
    %569 = vmatprep.subr.mxu0 0.0
    %570 = vmatpush1.msra.mxu0 0.0
    %571 = vmatprep.subr.mxu0 0.0
    %572 = vmatpush1.msra.mxu0 0.0
    %573 = vmatprep.subr.mxu0 0.0
    %574 = vmatpush1.msra.mxu0 0.0
    %575 = vmatprep.subr.mxu0 0.0
    %576 = vmatpush1.msra.mxu0 0.0
    %577 = vmatprep.mubr.f32.mxu0 0.0
    %578 = vmatmul.mubr.f32.gmra.mrb[0].mxu0 %v511
    %v579 = vpop.f32.mrb[0].mxu0
    %v580 = vadd.f32 0.0, %v579
    %v581 = vpop.f32.mrb[0].mxu0
    %v582 = vadd.f32 0.0, %v581
    %583 = vdwg.mxu0
    %s584 = scalar_lea.vmem [#allocation3], 32
    %v585 = vld [vmem:[%s584] sm:$0xff]
    %v586 = vadd.f32 %v580, %v585
    %v587 = vxor.u32 %v586, 2147483648
    %v588 = vmul.f32 %v587, 1.442695
    %v589 = vpow.pop %v588
    %v590 = vadd.f32 %v589, 1.0
    %v591 = vrcp.pop %v590
    %v592 = vmul.f32 1.0, %v591
    %v593 = vtanh.pop %v586
    %v594 = vmul.f32 %v592, %v469
    %596 = vrot.lane.b32.xlu0 %v593, 32
    %v597 = vpop.permute.xlu0 %596
    %v599 = vmul.f32 %v592, %v597
    %601 = vrot.lane.b32.xlu0 %v599, 32
    %v602 = vpop.permute.xlu0 %601
    %v604 = vadd.f32 %v594, %v602
    %v605 = vtanh.pop %v604
    %607 = vrot.lane.b32.xlu0 %v605, 32
    %v608 = vpop.permute.xlu0 %607
    %v610 = vmul.f32 %v592, %v608
    %v611 = vadd.f32 %v582, %v204
    %v612 = vxor.u32 %v611, 2147483648
    %v613 = vmul.f32 %v612, 1.442695
    %v614 = vpow.pop %v613
    %v615 = vadd.f32 %v614, 1.0
    %v616 = vrcp.pop %v615
    %v617 = vmul.f32 1.0, %v616
    %v618 = vtanh.pop %v611
    %v619 = vmul.f32 %v617, %v494
    %621 = vrot.lane.b32.xlu0 %v618, 32
    %v622 = vpop.permute.xlu0 %621
    %v624 = vmul.f32 %v617, %v622
    %626 = vrot.lane.b32.xlu0 %v624, 32
    %v627 = vpop.permute.xlu0 %626
    %v629 = vadd.f32 %v619, %v627
    %v630 = vtanh.pop %v629
    %632 = vrot.lane.b32.xlu0 %v630, 32
    %v633 = vpop.permute.xlu0 %632
    %v635 = vmul.f32 %v617, %v633
    %637 = vrot.lane.b32.xlu0 %v610, 64
    %v638 = vpop.permute.xlu0 %637
    %641 = vrot.lane.b32.xlu0 %v635, 96
    %v642 = vpop.permute.xlu0 %641
    %v644 = vsel %vm96, %v638, %v642
    %v646 = vsel %vm98, %v644, 0
    %648 = vmatprep.subr.mxu0 %v51
    %649 = vmatpush1.msra.mxu0 %v50
    %650 = vmatprep.subr.mxu0 %v53
    %651 = vmatpush1.msra.mxu0 %v52
    %652 = vmatprep.subr.mxu0 %v55
    %653 = vmatpush1.msra.mxu0 %v54
    %654 = vmatprep.subr.mxu0 %v57
    %655 = vmatpush1.msra.mxu0 %v56
    %656 = vmatprep.subr.mxu0 %v59
    %657 = vmatpush1.msra.mxu0 %v58
    %658 = vmatprep.subr.mxu0 %v61
    %659 = vmatpush1.msra.mxu0 %v60
    %660 = vmatprep.subr.mxu0 %v63
    %661 = vmatpush1.msra.mxu0 %v62
    %662 = vmatprep.subr.mxu0 %v65
    %663 = vmatpush1.msra.mxu0 %v64
    %664 = vmatprep.subr.mxu0 0.0
    %665 = vmatpush1.msra.mxu0 0.0
    %666 = vmatprep.subr.mxu0 0.0
    %667 = vmatpush1.msra.mxu0 0.0
    %668 = vmatprep.subr.mxu0 0.0
    %669 = vmatpush1.msra.mxu0 0.0
    %670 = vmatprep.subr.mxu0 0.0
    %671 = vmatpush1.msra.mxu0 0.0
    %672 = vmatprep.subr.mxu0 0.0
    %673 = vmatpush1.msra.mxu0 0.0
    %674 = vmatprep.subr.mxu0 0.0
    %675 = vmatpush1.msra.mxu0 0.0
    %676 = vmatprep.subr.mxu0 0.0
    %677 = vmatpush1.msra.mxu0 0.0
    %678 = vmatprep.subr.mxu0 0.0
    %679 = vmatpush1.msra.mxu0 0.0
    %680 = vmatprep.subr.mxu0 0.0
    %681 = vmatpush1.msra.mxu0 0.0
    %682 = vmatprep.subr.mxu0 0.0
    %683 = vmatpush1.msra.mxu0 0.0
    %684 = vmatprep.subr.mxu0 0.0
    %685 = vmatpush1.msra.mxu0 0.0
    %686 = vmatprep.subr.mxu0 0.0
    %687 = vmatpush1.msra.mxu0 0.0
    %688 = vmatprep.subr.mxu0 0.0
    %689 = vmatpush1.msra.mxu0 0.0
    %690 = vmatprep.subr.mxu0 0.0
    %691 = vmatpush1.msra.mxu0 0.0
    %692 = vmatprep.subr.mxu0 0.0
    %693 = vmatpush1.msra.mxu0 0.0
    %694 = vmatprep.subr.mxu0 0.0
    %695 = vmatpush1.msra.mxu0 0.0
    %696 = vmatprep.subr.mxu0 0.0
    %697 = vmatpush1.msra.mxu0 0.0
    %698 = vmatprep.subr.mxu0 0.0
    %699 = vmatpush1.msra.mxu0 0.0
    %700 = vmatprep.subr.mxu0 0.0
    %701 = vmatpush1.msra.mxu0 0.0
    %702 = vmatprep.subr.mxu0 0.0
    %703 = vmatpush1.msra.mxu0 0.0
    %704 = vmatprep.subr.mxu0 0.0
    %705 = vmatpush1.msra.mxu0 0.0
    %706 = vmatprep.subr.mxu0 0.0
    %707 = vmatpush1.msra.mxu0 0.0
    %708 = vmatprep.subr.mxu0 0.0
    %709 = vmatpush1.msra.mxu0 0.0
    %710 = vmatprep.subr.mxu0 0.0
    %711 = vmatpush1.msra.mxu0 0.0
    %712 = vmatprep.mubr.f32.mxu0 0.0
    %713 = vmatmul.mubr.f32.gmra.mrb[0].mxu0 %v646
    %v714 = vpop.f32.mrb[0].mxu0
    %v715 = vadd.f32 0.0, %v714
    %v716 = vpop.f32.mrb[0].mxu0
    %v717 = vadd.f32 0.0, %v716
    %718 = vdwg.mxu0
    %s719 = scalar_lea.vmem [#allocation3], 40
    %v720 = vld [vmem:[%s719] sm:$0xff]
    %v721 = vadd.f32 %v715, %v720
    %v722 = vxor.u32 %v721, 2147483648
    %v723 = vmul.f32 %v722, 1.442695
    %v724 = vpow.pop %v723
    %v725 = vadd.f32 %v724, 1.0
    %v726 = vrcp.pop %v725
    %v727 = vmul.f32 1.0, %v726
    %v728 = vtanh.pop %v721
    %v729 = vmul.f32 %v727, %v604
    %731 = vrot.lane.b32.xlu0 %v728, 32
    %v732 = vpop.permute.xlu0 %731
    %v734 = vmul.f32 %v727, %v732
    %736 = vrot.lane.b32.xlu0 %v734, 32
    %v737 = vpop.permute.xlu0 %736
    %v739 = vadd.f32 %v729, %v737
    %v740 = vtanh.pop %v739
    %742 = vrot.lane.b32.xlu0 %v740, 32
    %v743 = vpop.permute.xlu0 %742
    %v745 = vmul.f32 %v727, %v743
    %v746 = vadd.f32 %v717, %v204
    %v747 = vxor.u32 %v746, 2147483648
    %v748 = vmul.f32 %v747, 1.442695
    %v749 = vpow.pop %v748
    %v750 = vadd.f32 %v749, 1.0
    %v751 = vrcp.pop %v750
    %v752 = vmul.f32 1.0, %v751
    %v753 = vtanh.pop %v746
    %v754 = vmul.f32 %v752, %v629
    %756 = vrot.lane.b32.xlu0 %v753, 32
    %v757 = vpop.permute.xlu0 %756
    %v759 = vmul.f32 %v752, %v757
    %761 = vrot.lane.b32.xlu0 %v759, 32
    %v762 = vpop.permute.xlu0 %761
    %v764 = vadd.f32 %v754, %v762
    %v765 = vtanh.pop %v764
    %767 = vrot.lane.b32.xlu0 %v765, 32
    %v768 = vpop.permute.xlu0 %767
    %v770 = vmul.f32 %v752, %v768
    %772 = vrot.lane.b32.xlu0 %v745, 64
    %v773 = vpop.permute.xlu0 %772
    %776 = vrot.lane.b32.xlu0 %v770, 96
    %v777 = vpop.permute.xlu0 %776
    %v779 = vsel %vm96, %v773, %v777
    %v781 = vsel %vm98, %v779, 0
    %783 = vmatprep.subr.mxu0 %v51
    %784 = vmatpush1.msra.mxu0 %v50
    %785 = vmatprep.subr.mxu0 %v53
    %786 = vmatpush1.msra.mxu0 %v52
    %787 = vmatprep.subr.mxu0 %v55
    %788 = vmatpush1.msra.mxu0 %v54
    %789 = vmatprep.subr.mxu0 %v57
    %790 = vmatpush1.msra.mxu0 %v56
    %791 = vmatprep.subr.mxu0 %v59
    %792 = vmatpush1.msra.mxu0 %v58
    %793 = vmatprep.subr.mxu0 %v61
    %794 = vmatpush1.msra.mxu0 %v60
    %795 = vmatprep.subr.mxu0 %v63
    %796 = vmatpush1.msra.mxu0 %v62
    %797 = vmatprep.subr.mxu0 %v65
    %798 = vmatpush1.msra.mxu0 %v64
    %799 = vmatprep.subr.mxu0 0.0
    %800 = vmatpush1.msra.mxu0 0.0
    %801 = vmatprep.subr.mxu0 0.0
    %802 = vmatpush1.msra.mxu0 0.0
    %803 = vmatprep.subr.mxu0 0.0
    %804 = vmatpush1.msra.mxu0 0.0
    %805 = vmatprep.subr.mxu0 0.0
    %806 = vmatpush1.msra.mxu0 0.0
    %807 = vmatprep.subr.mxu0 0.0
    %808 = vmatpush1.msra.mxu0 0.0
    %809 = vmatprep.subr.mxu0 0.0
    %810 = vmatpush1.msra.mxu0 0.0
    %811 = vmatprep.subr.mxu0 0.0
    %812 = vmatpush1.msra.mxu0 0.0
    %813 = vmatprep.subr.mxu0 0.0
    %814 = vmatpush1.msra.mxu0 0.0
    %815 = vmatprep.subr.mxu0 0.0
    %816 = vmatpush1.msra.mxu0 0.0
    %817 = vmatprep.subr.mxu0 0.0
    %818 = vmatpush1.msra.mxu0 0.0
    %819 = vmatprep.subr.mxu0 0.0
    %820 = vmatpush1.msra.mxu0 0.0
    %821 = vmatprep.subr.mxu0 0.0
    %822 = vmatpush1.msra.mxu0 0.0
    %823 = vmatprep.subr.mxu0 0.0
    %824 = vmatpush1.msra.mxu0 0.0
    %825 = vmatprep.subr.mxu0 0.0
    %826 = vmatpush1.msra.mxu0 0.0
    %827 = vmatprep.subr.mxu0 0.0
    %828 = vmatpush1.msra.mxu0 0.0
    %829 = vmatprep.subr.mxu0 0.0
    %830 = vmatpush1.msra.mxu0 0.0
    %831 = vmatprep.subr.mxu0 0.0
    %832 = vmatpush1.msra.mxu0 0.0
    %833 = vmatprep.subr.mxu0 0.0
    %834 = vmatpush1.msra.mxu0 0.0
    %835 = vmatprep.subr.mxu0 0.0
    %836 = vmatpush1.msra.mxu0 0.0
    %837 = vmatprep.subr.mxu0 0.0
    %838 = vmatpush1.msra.mxu0 0.0
    %839 = vmatprep.subr.mxu0 0.0
    %840 = vmatpush1.msra.mxu0 0.0
    %841 = vmatprep.subr.mxu0 0.0
    %842 = vmatpush1.msra.mxu0 0.0
    %843 = vmatprep.subr.mxu0 0.0
    %844 = vmatpush1.msra.mxu0 0.0
    %845 = vmatprep.subr.mxu0 0.0
    %846 = vmatpush1.msra.mxu0 0.0
    %847 = vmatprep.mubr.f32.mxu0 0.0
    %848 = vmatmul.mubr.f32.gmra.mrb[0].mxu0 %v781
    %v849 = vpop.f32.mrb[0].mxu0
    %v850 = vadd.f32 0.0, %v849
    %v851 = vpop.f32.mrb[0].mxu0
    %v852 = vadd.f32 0.0, %v851
    %853 = vdwg.mxu0
    %s854 = scalar_lea.vmem [#allocation3], 48
    %v855 = vld [vmem:[%s854] sm:$0xff]
    %v856 = vadd.f32 %v850, %v855
    %v857 = vxor.u32 %v856, 2147483648
    %v858 = vmul.f32 %v857, 1.442695
    %v859 = vpow.pop %v858
    %v860 = vadd.f32 %v859, 1.0
    %v861 = vrcp.pop %v860
    %v862 = vmul.f32 1.0, %v861
    %v863 = vtanh.pop %v856
    %v864 = vmul.f32 %v862, %v739
    %866 = vrot.lane.b32.xlu0 %v863, 32
    %v867 = vpop.permute.xlu0 %866
    %v869 = vmul.f32 %v862, %v867
    %871 = vrot.lane.b32.xlu0 %v869, 32
    %v872 = vpop.permute.xlu0 %871
    %v874 = vadd.f32 %v864, %v872
    %v875 = vtanh.pop %v874
    %877 = vrot.lane.b32.xlu0 %v875, 32
    %v878 = vpop.permute.xlu0 %877
    %v880 = vmul.f32 %v862, %v878
    %v881 = vadd.f32 %v852, %v204
    %v882 = vxor.u32 %v881, 2147483648
    %v883 = vmul.f32 %v882, 1.442695
    %v884 = vpow.pop %v883
    %v885 = vadd.f32 %v884, 1.0
    %v886 = vrcp.pop %v885
    %v887 = vmul.f32 1.0, %v886
    %v888 = vtanh.pop %v881
    %v889 = vmul.f32 %v887, %v764
    %891 = vrot.lane.b32.xlu0 %v888, 32
    %v892 = vpop.permute.xlu0 %891
    %v894 = vmul.f32 %v887, %v892
    %896 = vrot.lane.b32.xlu0 %v894, 32
    %v897 = vpop.permute.xlu0 %896
    %v899 = vadd.f32 %v889, %v897
    %v900 = vtanh.pop %v899
    %902 = vrot.lane.b32.xlu0 %v900, 32
    %v903 = vpop.permute.xlu0 %902
    %v905 = vmul.f32 %v887, %v903
    %907 = vrot.lane.b32.xlu0 %v880, 64
    %v908 = vpop.permute.xlu0 %907
    %911 = vrot.lane.b32.xlu0 %v905, 96
    %v912 = vpop.permute.xlu0 %911
    %v914 = vsel %vm96, %v908, %v912
    %v916 = vsel %vm98, %v914, 0
    %918 = vmatprep.subr.mxu0 %v51
    %919 = vmatpush1.msra.mxu0 %v50
    %920 = vmatprep.subr.mxu0 %v53
    %921 = vmatpush1.msra.mxu0 %v52
    %922 = vmatprep.subr.mxu0 %v55
    %923 = vmatpush1.msra.mxu0 %v54
    %924 = vmatprep.subr.mxu0 %v57
    %925 = vmatpush1.msra.mxu0 %v56
    %926 = vmatprep.subr.mxu0 %v59
    %927 = vmatpush1.msra.mxu0 %v58
    %928 = vmatprep.subr.mxu0 %v61
    %929 = vmatpush1.msra.mxu0 %v60
    %930 = vmatprep.subr.mxu0 %v63
    %931 = vmatpush1.msra.mxu0 %v62
    %932 = vmatprep.subr.mxu0 %v65
    %933 = vmatpush1.msra.mxu0 %v64
    %934 = vmatprep.subr.mxu0 0.0
    %935 = vmatpush1.msra.mxu0 0.0
    %936 = vmatprep.subr.mxu0 0.0
    %937 = vmatpush1.msra.mxu0 0.0
    %938 = vmatprep.subr.mxu0 0.0
    %939 = vmatpush1.msra.mxu0 0.0
    %940 = vmatprep.subr.mxu0 0.0
    %941 = vmatpush1.msra.mxu0 0.0
    %942 = vmatprep.subr.mxu0 0.0
    %943 = vmatpush1.msra.mxu0 0.0
    %944 = vmatprep.subr.mxu0 0.0
    %945 = vmatpush1.msra.mxu0 0.0
    %946 = vmatprep.subr.mxu0 0.0
    %947 = vmatpush1.msra.mxu0 0.0
    %948 = vmatprep.subr.mxu0 0.0
    %949 = vmatpush1.msra.mxu0 0.0
    %950 = vmatprep.subr.mxu0 0.0
    %951 = vmatpush1.msra.mxu0 0.0
    %952 = vmatprep.subr.mxu0 0.0
    %953 = vmatpush1.msra.mxu0 0.0
    %954 = vmatprep.subr.mxu0 0.0
    %955 = vmatpush1.msra.mxu0 0.0
    %956 = vmatprep.subr.mxu0 0.0
    %957 = vmatpush1.msra.mxu0 0.0
    %958 = vmatprep.subr.mxu0 0.0
    %959 = vmatpush1.msra.mxu0 0.0
    %960 = vmatprep.subr.mxu0 0.0
    %961 = vmatpush1.msra.mxu0 0.0
    %962 = vmatprep.subr.mxu0 0.0
    %963 = vmatpush1.msra.mxu0 0.0
    %964 = vmatprep.subr.mxu0 0.0
    %965 = vmatpush1.msra.mxu0 0.0
    %966 = vmatprep.subr.mxu0 0.0
    %967 = vmatpush1.msra.mxu0 0.0
    %968 = vmatprep.subr.mxu0 0.0
    %969 = vmatpush1.msra.mxu0 0.0
    %970 = vmatprep.subr.mxu0 0.0
    %971 = vmatpush1.msra.mxu0 0.0
    %972 = vmatprep.subr.mxu0 0.0
    %973 = vmatpush1.msra.mxu0 0.0
    %974 = vmatprep.subr.mxu0 0.0
    %975 = vmatpush1.msra.mxu0 0.0
    %976 = vmatprep.subr.mxu0 0.0
    %977 = vmatpush1.msra.mxu0 0.0
    %978 = vmatprep.subr.mxu0 0.0
    %979 = vmatpush1.msra.mxu0 0.0
    %980 = vmatprep.subr.mxu0 0.0
    %981 = vmatpush1.msra.mxu0 0.0
    %982 = vmatprep.mubr.f32.mxu0 0.0
    %983 = vmatmul.mubr.f32.gmra.mrb[0].mxu0 %v916
    %v984 = vpop.f32.mrb[0].mxu0
    %v985 = vadd.f32 0.0, %v984
    %v986 = vpop.f32.mrb[0].mxu0
    %v987 = vadd.f32 0.0, %v986
    %988 = vdwg.mxu0
    %s989 = scalar_lea.vmem [#allocation3], 56
    %v990 = vld [vmem:[%s989] sm:$0xff]
    %v991 = vadd.f32 %v985, %v990
    %v992 = vxor.u32 %v991, 2147483648
    %v993 = vmul.f32 %v992, 1.442695
    %v994 = vpow.pop %v993
    %v995 = vadd.f32 %v994, 1.0
    %v996 = vrcp.pop %v995
    %v997 = vmul.f32 1.0, %v996
    %v998 = vtanh.pop %v991
    %v999 = vmul.f32 %v997, %v874
    %1001 = vrot.lane.b32.xlu0 %v998, 32
    %v1002 = vpop.permute.xlu0 %1001
    %v1004 = vmul.f32 %v997, %v1002
    %1006 = vrot.lane.b32.xlu0 %v1004, 32
    %v1007 = vpop.permute.xlu0 %1006
    %v1009 = vadd.f32 %v999, %v1007
    %v1010 = vtanh.pop %v1009
    %1012 = vrot.lane.b32.xlu0 %v1010, 32
    %v1013 = vpop.permute.xlu0 %1012
    %v1015 = vmul.f32 %v997, %v1013
    %v1016 = vadd.f32 %v987, %v204
    %v1017 = vxor.u32 %v1016, 2147483648
    %v1018 = vmul.f32 %v1017, 1.442695
    %v1019 = vpow.pop %v1018
    %v1020 = vadd.f32 %v1019, 1.0
    %v1021 = vrcp.pop %v1020
    %v1022 = vmul.f32 1.0, %v1021
    %v1023 = vtanh.pop %v1016
    %v1024 = vmul.f32 %v1022, %v899
    %1026 = vrot.lane.b32.xlu0 %v1023, 32
    %v1027 = vpop.permute.xlu0 %1026
    %v1029 = vmul.f32 %v1022, %v1027
    %1031 = vrot.lane.b32.xlu0 %v1029, 32
    %v1032 = vpop.permute.xlu0 %1031
    %v1034 = vadd.f32 %v1024, %v1032
    %v1035 = vtanh.pop %v1034
    %1037 = vrot.lane.b32.xlu0 %v1035, 32
    %v1038 = vpop.permute.xlu0 %1037
    %v1040 = vmul.f32 %v1022, %v1038
    %1042 = vrot.lane.b32.xlu0 %v1015, 64
    %v1043 = vpop.permute.xlu0 %1042
    %1046 = vrot.lane.b32.xlu0 %v1040, 96
    %v1047 = vpop.permute.xlu0 %1046
    %v1049 = vsel %vm96, %v1043, %v1047
    %v1051 = vsel %vm98, %v1049, 0
    %1053 = vmatprep.subr.mxu0 0.0
    %1054 = vmatpush1.msra.mxu0 %v51
    %1055 = vmatprep.subr.mxu0 0.0
    %1056 = vmatpush1.msra.mxu0 %v53
    %1057 = vmatprep.subr.mxu0 0.0
    %1058 = vmatpush1.msra.mxu0 %v55
    %1059 = vmatprep.subr.mxu0 0.0
    %1060 = vmatpush1.msra.mxu0 %v57
    %1061 = vmatprep.subr.mxu0 0.0
    %1062 = vmatpush1.msra.mxu0 %v59
    %1063 = vmatprep.subr.mxu0 0.0
    %1064 = vmatpush1.msra.mxu0 %v61
    %1065 = vmatprep.subr.mxu0 0.0
    %1066 = vmatpush1.msra.mxu0 %v63
    %1067 = vmatprep.subr.mxu0 0.0
    %1068 = vmatpush1.msra.mxu0 %v65
    %1069 = vmatprep.subr.mxu0 0.0
    %1070 = vmatpush1.msra.mxu0 0.0
    %1071 = vmatprep.subr.mxu0 0.0
    %1072 = vmatpush1.msra.mxu0 0.0
    %1073 = vmatprep.subr.mxu0 0.0
    %1074 = vmatpush1.msra.mxu0 0.0
    %1075 = vmatprep.subr.mxu0 0.0
    %1076 = vmatpush1.msra.mxu0 0.0
    %1077 = vmatprep.subr.mxu0 0.0
    %1078 = vmatpush1.msra.mxu0 0.0
    %1079 = vmatprep.subr.mxu0 0.0
    %1080 = vmatpush1.msra.mxu0 0.0
    %1081 = vmatprep.subr.mxu0 0.0
    %1082 = vmatpush1.msra.mxu0 0.0
    %1083 = vmatprep.subr.mxu0 0.0
    %1084 = vmatpush1.msra.mxu0 0.0
    %1085 = vmatprep.subr.mxu0 0.0
    %1086 = vmatpush1.msra.mxu0 0.0
    %1087 = vmatprep.subr.mxu0 0.0
    %1088 = vmatpush1.msra.mxu0 0.0
    %1089 = vmatprep.subr.mxu0 0.0
    %1090 = vmatpush1.msra.mxu0 0.0
    %1091 = vmatprep.subr.mxu0 0.0
    %1092 = vmatpush1.msra.mxu0 0.0
    %1093 = vmatprep.subr.mxu0 0.0
    %1094 = vmatpush1.msra.mxu0 0.0
    %1095 = vmatprep.subr.mxu0 0.0
    %1096 = vmatpush1.msra.mxu0 0.0
    %1097 = vmatprep.subr.mxu0 0.0
    %1098 = vmatpush1.msra.mxu0 0.0
    %1099 = vmatprep.subr.mxu0 0.0
    %1100 = vmatpush1.msra.mxu0 0.0
    %1101 = vmatprep.subr.mxu0 0.0
    %1102 = vmatpush1.msra.mxu0 0.0
    %1103 = vmatprep.subr.mxu0 0.0
    %1104 = vmatpush1.msra.mxu0 0.0
    %1105 = vmatprep.subr.mxu0 0.0
    %1106 = vmatpush1.msra.mxu0 0.0
    %1107 = vmatprep.subr.mxu0 0.0
    %1108 = vmatpush1.msra.mxu0 0.0
    %1109 = vmatprep.subr.mxu0 0.0
    %1110 = vmatpush1.msra.mxu0 0.0
    %1111 = vmatprep.subr.mxu0 0.0
    %1112 = vmatpush1.msra.mxu0 0.0
    %1113 = vmatprep.subr.mxu0 0.0
    %1114 = vmatpush1.msra.mxu0 0.0
    %1115 = vmatprep.subr.mxu0 0.0
    %1116 = vmatpush1.msra.mxu0 0.0
    %1117 = vmatprep.mubr.f32.mxu0 0.0
    %1118 = vmatmul.mubr.f32.gmra.mrb[0].mxu0 %v1051
    %v1119 = vpop.f32.mrb[0].mxu0
    %v1120 = vadd.f32 %v204, %v1119
    %v1121 = vpop.f32.mrb[0].mxu0
    %1122 = vdwg.mxu0
    %v1123 = vxor.u32 %v1120, 2147483648
    %v1124 = vmul.f32 %v1123, 1.442695
    %v1125 = vpow.pop %v1124
    %v1126 = vadd.f32 %v1125, 1.0
    %v1127 = vrcp.pop %v1126
    %v1128 = vmul.f32 1.0, %v1127
    %v1129 = vtanh.pop %v1120
    %v1130 = vmul.f32 %v1128, %v1034
    %1132 = vrot.lane.b32.xlu0 %v1129, 32
    %v1133 = vpop.permute.xlu0 %1132
    %v1135 = vmul.f32 %v1128, %v1133
    %1137 = vrot.lane.b32.xlu0 %v1135, 32
    %v1138 = vpop.permute.xlu0 %1137
    %v1140 = vadd.f32 %v1130, %v1138
    %v1141 = vtanh.pop %v1140
    %1143 = vrot.lane.b32.xlu0 %v1141, 32
    %v1144 = vpop.permute.xlu0 %1143
    %v1146 = vmul.f32 %v1128, %v1144
    %v1147 = vld [vmem:[%s3] sm:$0x1]
    %v1149 = vlaneseq
    %v1150 = vshrl.u32 %v1149, 7
    %v1151 = vsub.s32 0, %v1150
    %v1152 = vrot.slane %v1147, %v1151
    %1153 = vrot.lane.b32.xlu0 %v1152, 64
    %v1154 = vpop.permute.xlu0 %1153
    %v1156 = vmul.f32 %v1146, %v1154
    %1158 = vrot.lane.b32.xlu0 %v1156, 64
    %v1159 = vpop.permute.xlu0 %1158
    %v1161 = vsel %vm96, %v1159, 0.0
    %1162 = vadd.xlane.f32.xlu0 %v1161
    %v1163 = vpop.xlane.xlu0 %1162
    %v1164 = vld [vmem:[#allocation2] sm:$0x1]
    %v1166 = vlaneseq
    %v1167 = vshrl.u32 %v1166, 7
    %v1168 = vsub.s32 0, %v1167
    %v1169 = vrot.slane %v1164, %v1168
    %v1171 = vadd.f32 %v1163, %v1169
    %v1172 = vtanh.pop %v1171
    %vm1173 = vcmask 7168
    %1174 = vst.msk [vmem:[%s5] sm:$0xff] %vm1173, %v1172
    // Predicated region
    $region30: #{tpu_custom_call.1} parent=1 // pred_check
      _
    $region31: #{tpu_custom_call.1} parent=1 // pred_check_branch
      %1176 = sbr.rel (0) target = $region33
    $region32: #{tpu_custom_call.1} parent=1 // pred_region
      _
    $region33: #{tpu_custom_call.1} parent=1 // pred_fallthru
      _
    // Predicated region
    $region34: #{tpu_custom_call.1} parent=1 // pred_check
      _
    $region35: #{tpu_custom_call.1} parent=1 // pred_check_branch
      %1178 = sbr.rel (0) target = $region37
    $region36: #{tpu_custom_call.1} parent=1 // pred_region
      _
    $region37: #{tpu_custom_call.1} parent=1 // pred_fallthru
      _
    %1179 = vsyncpa [#allocation4], 1
    %1180 = vsyncpa [#allocation6], 1

</llo_original>
